<compile_context>
chip_gen: v7x
topology: tpu7x:2x2x1
jax: 0.10.0
libtpu: 0.0.40
codegen_flags: <defaults>
</compile_context>

<pallas_src>
import functools

import jax
import jax.numpy as jnp
from jax.experimental import pallas as pl
from jax.experimental.pallas import tpu as pltpu


def _round_up(x, m):
    return (x + m - 1) // m * m


def _interp_matrix(n_out, n_in, dtype=jnp.float32):
    """(n_out, n_in) interpolation matrix for bilinear, align_corners=True."""
    if n_out == 1:
        coords = jnp.zeros((1,), jnp.float32)
    else:
        coords = jnp.arange(n_out, dtype=jnp.float32) * (n_in - 1) / (n_out - 1)
    lo = jnp.clip(jnp.floor(coords).astype(jnp.int32), 0, n_in - 1)
    hi = jnp.clip(lo + 1, 0, n_in - 1)
    frac = coords - lo.astype(jnp.float32)
    a = (jax.nn.one_hot(lo, n_in, dtype=jnp.float32) * (1.0 - frac)[:, None]
         + jax.nn.one_hot(hi, n_in, dtype=jnp.float32) * frac[:, None])
    return a.astype(dtype)


def _fuse_kernel(xl_ref, xh_ref, a_ref, w2_ref, b_ref, out_ref, *,
                 nb, ch, co, wp, phw_pad, margin):
    # ---- front-end (recomputed per step; cheap vs. the B-tile matmul) ----
    # First bilinear upsample, straight into zero-padded flat coords, M=nb*ch.
    xh = xh_ref[...].reshape(nb * ch, -1)                      # (nb*ch, Hh*Wh)
    up = jnp.dot(xh, a_ref[...], preferred_element_type=jnp.float32)
    up = up.astype(xl_ref.dtype).reshape(nb, ch, -1)           # (nb, ch, ext_w)

    # One fused slab [x_low | upsampled x_high], all bf16.
    slab = jnp.concatenate([xl_ref[...], up], axis=1)          # (nb, cc, ext_w)

    # 9-tap im2col from static lane-shifted slices + constant-ones bias row.
    pieces = []
    for dy in range(3):
        for dx in range(3):
            off = margin + (dy - 1) * wp + (dx - 1)
            pieces.append(slab[:, :, off:off + phw_pad])
    pieces.append(jnp.ones((nb, 1, phw_pad), slab.dtype))
    imcol = jnp.concatenate(pieces, axis=1)                    # (nb, 9*cc+1, phw_pad)

    # Fused depthwise + pointwise + BN(scale, bias) matmul per batch element,
    # then ReLU.  (nb is a small static block size: unrolled dots.)
    y = jnp.concatenate(
        [jnp.dot(w2_ref[...], imcol[b], preferred_element_type=jnp.float32)
         for b in range(nb)], axis=0)                          # (nb*co, phw_pad)
    y = jnp.maximum(y, 0.0).astype(b_ref.dtype)

    # ---- final bilinear upsample: one lane-dense MXU matmul, M = nb*co ----
    # Rows of B at pad / alignment-pad positions are zero -> junk columns of y
    # contribute nothing.
    out = jnp.dot(y, b_ref[...], preferred_element_type=jnp.float32)
    out_ref[...] = out.reshape(nb, co, -1).astype(out_ref.dtype)


def _pick_batch_block(n, nb_max=8):
    """Largest divisor of n that is <= nb_max."""
    for d in range(min(n, nb_max), 0, -1):
        if n % d == 0:
            return d
    return 1


def _vmem_capacity_bytes():
    try:
        return int(pltpu.get_tpu_info().vmem_capacity_bytes)
    except Exception:
        return 64 * 1024 * 1024          # conservative (v7x-sized) fallback


def _pick_ho_block(ho, wo, phw_pad, nb, co, b_bytes, out_bytes, budget_bytes):
    """Largest Ho tile (dividing Ho, 128-aligned lanes) fitting the VMEM budget."""
    per_lane = 2 * (phw_pad * b_bytes + nb * co * out_bytes)   # double-buffered
    max_lanes = max(128, budget_bytes // per_lane)
    if ho * wo <= max_lanes:
        return ho
    for t in range(ho, 0, -1):
        if ho % t == 0 and t * wo <= max_lanes and (t * wo) % 128 == 0:
            return t
    for t in range(1, ho + 1):            # smallest lane-aligned tile, if any
        if ho % t == 0 and (t * wo) % 128 == 0:
            return t
    return ho                             # cannot tile lane-aligned: run untiled


def fuse_forward(x_low, x_high, size, params, *, compute_dtype=jnp.bfloat16,
                 out_dtype=jnp.float32, ho_block=None, nb=None):
    n, cl, hl, wl = x_low.shape
    _, ch, hh, wh = x_high.shape
    ho, wo = size
    cc = cl + ch
    co = params['pw'].shape[0]

    wp = wl + 2                               # padded row width
    phw = (hl + 2) * wp                       # flattened padded image length
    phw_pad = _round_up(phw, 128)             # lane-aligned flat width
    margin = wp + 1                           # max |3x3 tap shift| in flat coords
    ext_w = _round_up(2 * margin + phw_pad, 128)

    c_bytes = jnp.dtype(compute_dtype).itemsize
    out_bytes = jnp.dtype(out_dtype).itemsize

    # ---- interpolation matrices (Kronecker, align_corners=True) ----
    ah = _interp_matrix(hl, hh)
    aw = _interp_matrix(wl, wh)
    bh = _interp_matrix(ho, hl)
    bw = _interp_matrix(wo, wl)

    # First upsample: (Hh*Wh) -> padded-flat ext_w; pad/margin columns are 0.
    a_full_t = jnp.kron(ah, aw).T.reshape(hh * wh, hl, wl)
    a_sp = jnp.zeros((hh * wh, hl + 2, wl + 2), jnp.float32)
    a_sp = a_sp.at[:, 1:1 + hl, 1:1 + wl].set(a_full_t)
    a_ext_t = jnp.pad(a_sp.reshape(hh * wh, phw),
                      ((0, 0), (margin, ext_w - margin - phw))).astype(compute_dtype)

    # Second upsample: padded-flat phw_pad -> (Ho*Wo); pad rows are 0.
    b_full_t = jnp.kron(bh, bw).T.reshape(hl, wl, ho * wo)
    b_sp = jnp.zeros((hl + 2, wl + 2, ho * wo), jnp.float32)
    b_sp = b_sp.at[1:1 + hl, 1:1 + wl, :].set(b_full_t)
    b_pad_t = jnp.pad(b_sp.reshape(phw, ho * wo),
                      ((0, phw_pad - phw), (0, 0))).astype(compute_dtype)

    # ---- fold depthwise + pointwise + BN scale into one matrix; bias -> col ----
    dw9 = params['dw'].reshape(cc, 9)                       # [c, k], k = dy*3 + dx
    w2 = (params['bn_scale'][:, None, None]
          * params['pw'][:, None, :]
          * dw9.T[None, :, :]).reshape(co, 9 * cc)
    w2 = jnp.concatenate([w2, params['bn_bias'][:, None]],
                         axis=1).astype(compute_dtype)      # (co, 9*cc + 1)

    # ---- activations in padded-flat, lane-dense layout (XLA-side plumbing) ----
    xl_flat = jnp.pad(x_low, ((0, 0), (0, 0), (1, 1), (1, 1))).reshape(n, cl, phw)
    xl_ext = jnp.pad(xl_flat, ((0, 0), (0, 0),
                               (margin, ext_w - margin - phw))).astype(compute_dtype)
    xh_flat = x_high.reshape(n, ch, hh * wh).astype(compute_dtype)

    # ---- batch / Ho tiling, VMEM-capacity aware (64 MiB v7x vs 128 MiB v5e/v6e) ----
    if nb is None:
        nb = _pick_batch_block(n)
    if n % nb != 0:
        raise ValueError("nb must divide the batch size")
    vmem_limit = min(_vmem_capacity_bytes() // 2, 100 * 1024 * 1024)
    resident = 2 * c_bytes * (nb * cl * ext_w + nb * ch * hh * wh
                              + hh * wh * ext_w + co * (9 * cc + 1))
    if ho_block is None:
        ho_block = _pick_ho_block(ho, wo, phw_pad, nb, co, c_bytes, out_bytes,
                                  max(vmem_limit * 3 // 4 - resident, 1 << 20))
    if ho % ho_block != 0:
        raise ValueError("ho_block must divide Ho")
    nt = ho // ho_block
    tile_lanes = ho_block * wo
    if nt > 1 and tile_lanes % 128 != 0:
        raise ValueError("ho_block * Wo must be a multiple of 128 when tiled")

    kernel = functools.partial(_fuse_kernel, nb=nb, ch=ch, co=co, wp=wp,
                               phw_pad=phw_pad, margin=margin)

    out_flat = pl.pallas_call(
        kernel,
        out_shape=jax.ShapeDtypeStruct((n, co, ho * wo), out_dtype),
        # Ho tiles OUTER, batch blocks INNER: the B tile's block index is
        # constant across the inner axis, so it is not re-streamed per batch.
        grid=(nt, n // nb),
        in_specs=[
            pl.BlockSpec((nb, cl, ext_w), lambda t, b: (b, 0, 0)),
            pl.BlockSpec((nb, ch, hh * wh), lambda t, b: (b, 0, 0)),
            pl.BlockSpec((hh * wh, ext_w), lambda t, b: (0, 0)),
            pl.BlockSpec((co, 9 * cc + 1), lambda t, b: (0, 0)),
            pl.BlockSpec((phw_pad, tile_lanes), lambda t, b: (0, t)),
        ],
        out_specs=pl.BlockSpec((nb, co, tile_lanes), lambda t, b: (b, 0, t)),
        compiler_params=pltpu.CompilerParams(
            dimension_semantics=("parallel", "parallel"),
            vmem_limit_bytes=vmem_limit),
    )(xl_ext, xh_flat, a_ext_t, w2, b_pad_t)

    return out_flat.reshape(n, co, ho, wo)


def fuse_reference(x_low, x_high, size, params):
    """Plain-JAX f32 reference mirroring the PyTorch forward."""
    n, cl, hl, wl = x_low.shape
    _, ch, hh, wh = x_high.shape
    ho, wo = size
    ah = _interp_matrix(hl, hh)
    aw = _interp_matrix(wl, wh)
    bh = _interp_matrix(ho, hl)
    bw = _interp_matrix(wo, wl)
    up = jnp.einsum('ph,nchw,qw->ncpq', ah, x_high, aw)
    cat = jnp.concatenate([x_low, up], axis=1)
    p = jnp.pad(cat, ((0, 0), (0, 0), (1, 1), (1, 1)))
    dw = params['dw']
    acc = jnp.zeros((n, cat.shape[1], hl, wl), jnp.float32)
    for dy in range(3):
        for dx in range(3):
            acc = acc + dw[None, :, dy, dx, None, None] * p[:, :, dy:dy + hl, dx:dx + wl]
    y = jnp.einsum('oc,nchw->nohw', params['pw'], acc)
    y = jnp.maximum(y * params['bn_scale'][None, :, None, None]
                    + params['bn_bias'][None, :, None, None], 0.0)
    return jnp.einsum('ph,nchw,qw->ncpq', bh, y, bw)


if __name__ == "__main__":
    key = jax.random.PRNGKey(0)
    k1, k2, k3, k4, k5, k6, k7, k8 = jax.random.split(key, 8)

    in_channels, hidden_channels, out_channels = 4, 4, 8
    n, hl, wl = 2, 16, 16       # x_low spatial
    hh, wh = 8, 8               # x_high spatial
    size = (32, 32)             # final output spatial
    cc = in_channels + hidden_channels

    x_low = jax.random.normal(k1, (n, in_channels, hl, wl), jnp.float32)
    x_high = jax.random.normal(k2, (n, hidden_channels, hh, wh), jnp.float32)

    # Deterministic synthetic parameters (DSC_BN_ACT(cc, out_channels, 3, 1, 1)).
    dw_w = jax.random.normal(k3, (cc, 3, 3), jnp.float32) * 0.2          # depthwise (Cc,1,3,3) squeezed
    pw_w = jax.random.normal(k4, (out_channels, cc), jnp.float32) * 0.2  # pointwise (Co,Cc,1,1) squeezed
    gamma = jax.random.uniform(k5, (out_channels,), jnp.float32, 0.5, 1.5)
    beta = jax.random.normal(k6, (out_channels,), jnp.float32) * 0.1
    run_mean = jax.random.normal(k7, (out_channels,), jnp.float32) * 0.1
    run_var = jax.random.uniform(k8, (out_channels,), jnp.float32, 0.5, 1.5)
    eps = 1e-5
    bn_scale = gamma / jnp.sqrt(run_var + eps)
    bn_bias = beta - run_mean * bn_scale

    params = dict(dw=dw_w, pw=pw_w, bn_scale=bn_scale, bn_bias=bn_bias)
    ref = fuse_reference(x_low, x_high, size, params)

    # 1) Auto tiling: VMEM-aware ho_block, batch-blocked grid (nb = n here).
    out = fuse_forward(x_low, x_high, size, params)
    out = jax.block_until_ready(out)
    assert out.shape == (n, out_channels, size[0], size[1])
    assert jnp.allclose(out, ref, atol=3e-2, rtol=3e-2), \
        float(jnp.max(jnp.abs(out - ref)))

    # 2) Explicit Ho tiling (2 lane-dense 512-wide B/out tiles) exercises the
    #    multi-step grid with the resident-B inner batch axis.
    out_t = fuse_forward(x_low, x_high, size, params, ho_block=16)
    out_t = jax.block_until_ready(out_t)
    assert jnp.allclose(out_t, ref, atol=3e-2, rtol=3e-2), \
        float(jnp.max(jnp.abs(out_t - ref)))

    print("KERNEL_OK")
</pallas_src>

<mosaic_0001>
module attributes {stable_mosaic.version = 11 : i64} {
  func.func @_fuse_kernel(%arg0: i32, %arg1: i32, %arg2: memref<2x4x512xbf16, #tpu.memory_space<vmem>>, %arg3: memref<2x4x64xbf16, #tpu.memory_space<vmem>>, %arg4: memref<64x512xbf16, #tpu.memory_space<vmem>>, %arg5: memref<8x73xbf16, #tpu.memory_space<vmem>>, %arg6: memref<384x1024xbf16, #tpu.memory_space<vmem>>, %arg7: memref<2x8x1024xf32, #tpu.memory_space<vmem>>) attributes {dimension_semantics = [#tpu.dimension_semantics<parallel>, #tpu.dimension_semantics<parallel>], iteration_bounds = array<i64: 1, 1>, scalar_prefetch = 0 : i64, scratch_operands = 0 : i64, tpu.core_type = #tpu.core_type<tc>, window_params = [{transform_indices = @transform_0, window_bounds = array<i64: 2, 4, 512>}, {transform_indices = @transform_1, window_bounds = array<i64: 2, 4, 64>}, {pipeline_mode = #tpu.pipeline_mode<synchronous>, transform_indices = @transform_2, window_bounds = array<i64: 64, 512>}, {pipeline_mode = #tpu.pipeline_mode<synchronous>, transform_indices = @transform_3, window_bounds = array<i64: 8, 73>}, {transform_indices = @transform_4, window_bounds = array<i64: 384, 1024>}, {transform_indices = @transform_5, window_bounds = array<i64: 2, 8, 1024>}]} {
    %c0 = arith.constant 0 : index
    %c0_0 = arith.constant 0 : index
    %c0_1 = arith.constant 0 : index
    %0 = vector.load %arg3[%c0, %c0_0, %c0_1] : memref<2x4x64xbf16, #tpu.memory_space<vmem>>, vector<2x4x64xbf16>
    %1 = vector.shape_cast %0 : vector<2x4x64xbf16> to vector<8x64xbf16>
    %c0_2 = arith.constant 0 : index
    %c0_3 = arith.constant 0 : index
    %2 = vector.load %arg4[%c0_2, %c0_3] : memref<64x512xbf16, #tpu.memory_space<vmem>>, vector<64x512xbf16>
    %cst = arith.constant dense<0.000000e+00> : vector<8x512xf32>
    %3 = tpu.matmul %1, %2, %cst {dimension_numbers = #tpu.dot_dimension_numbers<[1], [0], [0], [1], [0, 0, 1, 1], [], []>} : vector<8x64xbf16>, vector<64x512xbf16>, vector<8x512xf32> -> vector<8x512xf32>
    %4 = arith.truncf %3 : vector<8x512xf32> to vector<8x512xbf16>
    %5 = vector.shape_cast %4 : vector<8x512xbf16> to vector<2x4x512xbf16>
    %c0_4 = arith.constant 0 : index
    %c0_5 = arith.constant 0 : index
    %c0_6 = arith.constant 0 : index
    %6 = vector.load %arg2[%c0_4, %c0_5, %c0_6] : memref<2x4x512xbf16, #tpu.memory_space<vmem>>, vector<2x4x512xbf16>
    %7 = tpu.concatenate %6, %5 in 1 : vector<2x4x512xbf16>, vector<2x4x512xbf16> -> vector<2x8x512xbf16>
    %8 = vector.extract_strided_slice %7 {offsets = [0, 0, 0], sizes = [2, 8, 384], strides = [1, 1, 1]} : vector<2x8x512xbf16> to vector<2x8x384xbf16>
    %9 = vector.extract_strided_slice %7 {offsets = [0, 0, 1], sizes = [2, 8, 384], strides = [1, 1, 1]} : vector<2x8x512xbf16> to vector<2x8x384xbf16>
    %10 = vector.extract_strided_slice %7 {offsets = [0, 0, 2], sizes = [2, 8, 384], strides = [1, 1, 1]} : vector<2x8x512xbf16> to vector<2x8x384xbf16>
    %11 = vector.extract_strided_slice %7 {offsets = [0, 0, 18], sizes = [2, 8, 384], strides = [1, 1, 1]} : vector<2x8x512xbf16> to vector<2x8x384xbf16>
    %12 = vector.extract_strided_slice %7 {offsets = [0, 0, 19], sizes = [2, 8, 384], strides = [1, 1, 1]} : vector<2x8x512xbf16> to vector<2x8x384xbf16>
    %13 = vector.extract_strided_slice %7 {offsets = [0, 0, 20], sizes = [2, 8, 384], strides = [1, 1, 1]} : vector<2x8x512xbf16> to vector<2x8x384xbf16>
    %14 = vector.extract_strided_slice %7 {offsets = [0, 0, 36], sizes = [2, 8, 384], strides = [1, 1, 1]} : vector<2x8x512xbf16> to vector<2x8x384xbf16>
    %15 = vector.extract_strided_slice %7 {offsets = [0, 0, 37], sizes = [2, 8, 384], strides = [1, 1, 1]} : vector<2x8x512xbf16> to vector<2x8x384xbf16>
    %16 = vector.extract_strided_slice %7 {offsets = [0, 0, 38], sizes = [2, 8, 384], strides = [1, 1, 1]} : vector<2x8x512xbf16> to vector<2x8x384xbf16>
    %cst_7 = arith.constant 1.000000e+00 : bf16
    %17 = vector.broadcast %cst_7 : bf16 to vector<2x1x384xbf16>
    %18 = tpu.concatenate %8, %9, %10, %11, %12, %13, %14, %15, %16, %17 in 1 : vector<2x8x384xbf16>, vector<2x8x384xbf16>, vector<2x8x384xbf16>, vector<2x8x384xbf16>, vector<2x8x384xbf16>, vector<2x8x384xbf16>, vector<2x8x384xbf16>, vector<2x8x384xbf16>, vector<2x8x384xbf16>, vector<2x1x384xbf16> -> vector<2x73x384xbf16>
    %c0_8 = arith.constant 0 : index
    %c0_9 = arith.constant 0 : index
    %19 = vector.load %arg5[%c0_8, %c0_9] : memref<8x73xbf16, #tpu.memory_space<vmem>>, vector<8x73xbf16>
    %20 = vector.extract_strided_slice %18 {offsets = [0, 0, 0], sizes = [1, 73, 384], strides = [1, 1, 1]} : vector<2x73x384xbf16> to vector<1x73x384xbf16>
    %21 = vector.shape_cast %20 : vector<1x73x384xbf16> to vector<73x384xbf16>
    %cst_10 = arith.constant dense<0.000000e+00> : vector<8x384xf32>
    %22 = tpu.matmul %19, %21, %cst_10 {dimension_numbers = #tpu.dot_dimension_numbers<[1], [0], [0], [1], [0, 0, 1, 1], [], []>} : vector<8x73xbf16>, vector<73x384xbf16>, vector<8x384xf32> -> vector<8x384xf32>
    %c0_11 = arith.constant 0 : index
    %c0_12 = arith.constant 0 : index
    %23 = vector.load %arg5[%c0_11, %c0_12] : memref<8x73xbf16, #tpu.memory_space<vmem>>, vector<8x73xbf16>
    %24 = vector.extract_strided_slice %18 {offsets = [1, 0, 0], sizes = [1, 73, 384], strides = [1, 1, 1]} : vector<2x73x384xbf16> to vector<1x73x384xbf16>
    %25 = vector.shape_cast %24 : vector<1x73x384xbf16> to vector<73x384xbf16>
    %cst_13 = arith.constant dense<0.000000e+00> : vector<8x384xf32>
    %26 = tpu.matmul %23, %25, %cst_13 {dimension_numbers = #tpu.dot_dimension_numbers<[1], [0], [0], [1], [0, 0, 1, 1], [], []>} : vector<8x73xbf16>, vector<73x384xbf16>, vector<8x384xf32> -> vector<8x384xf32>
    %27 = tpu.concatenate %22, %26 in 0 : vector<8x384xf32>, vector<8x384xf32> -> vector<16x384xf32>
    %cst_14 = arith.constant 0.000000e+00 : f32
    %28 = vector.broadcast %cst_14 : f32 to vector<16x384xf32>
    %29 = arith.maximumf %27, %28 : vector<16x384xf32>
    %30 = arith.truncf %29 : vector<16x384xf32> to vector<16x384xbf16>
    %c0_15 = arith.constant 0 : index
    %c0_16 = arith.constant 0 : index
    %31 = vector.load %arg6[%c0_15, %c0_16] : memref<384x1024xbf16, #tpu.memory_space<vmem>>, vector<384x1024xbf16>
    %cst_17 = arith.constant dense<0.000000e+00> : vector<16x1024xf32>
    %32 = tpu.matmul %30, %31, %cst_17 {dimension_numbers = #tpu.dot_dimension_numbers<[1], [0], [0], [1], [0, 0, 1, 1], [], []>} : vector<16x384xbf16>, vector<384x1024xbf16>, vector<16x1024xf32> -> vector<16x1024xf32>
    %33 = vector.shape_cast %32 : vector<16x1024xf32> to vector<2x8x1024xf32>
    %c0_18 = arith.constant 0 : index
    %c0_19 = arith.constant 0 : index
    %c0_20 = arith.constant 0 : index
    %34 = vector.load %arg7[%c0_18, %c0_19, %c0_20] : memref<2x8x1024xf32, #tpu.memory_space<vmem>>, vector<2x8x1024xf32>
    tpu.vector_store %arg7[%c0_18, %c0_19, %c0_20], %33 {strides = array<i32>} : memref<2x8x1024xf32, #tpu.memory_space<vmem>>, vector<2x8x1024xf32>,
    return
  }
  func.func @transform_0(%arg0: i32, %arg1: i32) -> (i32, i32, i32) {
    %c0_i32 = arith.constant 0 : i32
    %c0_i32_0 = arith.constant 0 : i32
    %c0_i32_1 = arith.constant 0 : i32
    return %arg1, %c0_i32, %c0_i32_0 : i32, i32, i32
  }
  func.func @transform_1(%arg0: i32, %arg1: i32) -> (i32, i32, i32) {
    %c0_i32 = arith.constant 0 : i32
    %c0_i32_0 = arith.constant 0 : i32
    %c0_i32_1 = arith.constant 0 : i32
    return %arg1, %c0_i32, %c0_i32_0 : i32, i32, i32
  }
  func.func @transform_2(%arg0: i32, %arg1: i32) -> (i32, i32) {
    %c0_i32 = arith.constant 0 : i32
    %c0_i32_0 = arith.constant 0 : i32
    %c0_i32_1 = arith.constant 0 : i32
    return %c0_i32, %c0_i32_0 : i32, i32
  }
  func.func @transform_3(%arg0: i32, %arg1: i32) -> (i32, i32) {
    %c0_i32 = arith.constant 0 : i32
    %c0_i32_0 = arith.constant 0 : i32
    %c0_i32_1 = arith.constant 0 : i32
    return %c0_i32, %c0_i32_0 : i32, i32
  }
  func.func @transform_4(%arg0: i32, %arg1: i32) -> (i32, i32) {
    %c0_i32 = arith.constant 0 : i32
    %c0_i32_0 = arith.constant 0 : i32
    return %c0_i32, %arg0 : i32, i32
  }
  func.func @transform_5(%arg0: i32, %arg1: i32) -> (i32, i32, i32) {
    %c0_i32 = arith.constant 0 : i32
    %c0_i32_0 = arith.constant 0 : i32
    return %arg1, %c0_i32, %arg0 : i32, i32, i32
  }
}

</mosaic_0001>

<llo_original>
// kernel: tpu_custom_call.1
$region0: #{tpu_custom_call.1}
  #allocation0 [shape = 'u32[]', space=smem, size = 0x4, offset = 0x4, fixed_abs, tag = 'smem constant byte address 0x4 - core index']
  #allocation1 [shape = 'u32[144,128]{1,0:T(1,128)}', space=vmem, size = 0x12000, scoped, tag = 'internal scratch']
  %s0 = inlined_call_operand.hbm [shape: bf16[2,4,512], index: 0, kind: input, shape index: {}]
  %s1 = inlined_call_operand.hbm [shape: bf16[2,4,64], index: 1, kind: input, shape index: {}]
  %s2 = inlined_call_operand.hbm [shape: bf16[64,512], index: 2, kind: input, shape index: {}]
  %s3 = inlined_call_operand.vmem [shape: bf16[8,73], index: 3, kind: input, shape index: {}]
  %s4 = inlined_call_operand.hbm [shape: bf16[384,1024], index: 4, kind: input, shape index: {}]
  %s5 = inlined_call_operand.hbm [shape: f32[2,8,1024], index: 5, kind: output, shape index: {}]
  %s6 = sld [smem:[#allocation0]]
  $region46: #{tpu_custom_call.1} parent=0
    _
  %s8 = ssub.s32 1, %s6
  %s9 = scalar_select 0, %s8, %s6
  $region1: #{tpu_custom_call.1} parent=0
    #allocation2 [shape = 'u8[8192]{0}', space=vmem, size = 0x2000, scoped, tag = 'input window, operand 0, single buffered']
    #allocation3 [shape = 's32[1]{0}', space=sflag, size = 0x4, scoped, tag = 'scoped memory for tpu_custom_call.1']
    #allocation4 [shape = 's32[1]{0}', space=sflag, size = 0x4, scoped, tag = 'scoped memory for tpu_custom_call.1']
    #allocation5 [shape = 'u8[2048]{0}', space=vmem, size = 0x800, scoped, tag = 'input window, operand 1, single buffered']
    #allocation6 [shape = 's32[1]{0}', space=sflag, size = 0x4, scoped, tag = 'scoped memory for tpu_custom_call.1']
    #allocation7 [shape = 'u8[65536]{0}', space=vmem, size = 0x10000, scoped, tag = 'input window, operand 2, single buffered']
    #allocation8 [shape = 'u8[786432]{0}', space=vmem, size = 0xc0000, scoped, tag = 'input window, operand 4, single buffered']
    #allocation9 [shape = 's32[1]{0}', space=sflag, size = 0x4, scoped, tag = 'scoped memory for tpu_custom_call.1']
    #allocation10 [shape = 'u8[65536]{0}', space=vmem, size = 0x10000, scoped, tag = 'output window, operand 0, single buffered']
    %10 = vsyncpa [#allocation3], 0
    %11 = vsyncpa [#allocation6], 0
    %12 = vsyncpa [#allocation9], 0
    %13 = vsyncpa [#allocation4], 0
    // Predicated region
    $region2: #{tpu_custom_call.1} parent=1 // pred_check
      _
    $region3: #{tpu_custom_call.1} parent=1 // pred_check_branch
      %15 = sbr.rel (0) target = $region5
    $region4: #{tpu_custom_call.1} parent=1 // pred_region
      %s17 = ssub.s32 256, 256
      %18 = vsyncadd [#allocation3], %s17
      %s19 = sshll.u32 [#allocation2], 4
      %s20 = int_to_ptr.vmem [resolvable:$true] %s19
      %25 = dma.hbm_to_vmem [thread:$0]  %s0, 256, %s20, [#allocation3], 128, 128, 8
    $region5: #{tpu_custom_call.1} parent=1 // pred_fallthru
      _
    // Predicated region
    $region6: #{tpu_custom_call.1} parent=1 // pred_check
      _
    $region7: #{tpu_custom_call.1} parent=1 // pred_check_branch
      %27 = sbr.rel (0) target = $region9
    $region8: #{tpu_custom_call.1} parent=1 // pred_region
      %s29 = ssub.s32 64, 64
      %30 = vsyncadd [#allocation6], %s29
      %s31 = sshll.u32 [#allocation5], 4
      %s32 = int_to_ptr.vmem [resolvable:$true] %s31
      %37 = dma.hbm_to_vmem [thread:$0]  %s1, 64, %s32, [#allocation6], 32, 32, 2
    $region9: #{tpu_custom_call.1} parent=1 // pred_fallthru
      _
    // Predicated region
    $region10: #{tpu_custom_call.1} parent=1 // pred_check
      _
    $region11: #{tpu_custom_call.1} parent=1 // pred_check_branch
      %39 = sbr.rel (0) target = $region13
    $region12: #{tpu_custom_call.1} parent=1 // pred_region
      %s41 = ssub.s32 2048, 2048
      %42 = vsyncadd [#allocation6], %s41
      %s43 = sshll.u32 [#allocation7], 4
      %s44 = int_to_ptr.vmem [resolvable:$true] %s43
      %49 = dma.hbm_to_vmem [thread:$0]  %s2, 2048, %s44, [#allocation6], 256, 256, 16
    $region13: #{tpu_custom_call.1} parent=1 // pred_fallthru
      _
    // Predicated region
    $region14: #{tpu_custom_call.1} parent=1 // pred_check
      _
    $region15: #{tpu_custom_call.1} parent=1 // pred_check_branch
      %51 = sbr.rel (0) target = $region17
    $region16: #{tpu_custom_call.1} parent=1 // pred_region
      _
    $region17: #{tpu_custom_call.1} parent=1 // pred_fallthru
      _
    // Predicated region
    $region18: #{tpu_custom_call.1} parent=1 // pred_check
      _
    $region19: #{tpu_custom_call.1} parent=1 // pred_check_branch
      %53 = sbr.rel (0) target = $region21
    $region20: #{tpu_custom_call.1} parent=1 // pred_region
      %s55 = ssub.s32 24576, 24576
      %56 = vsyncadd [#allocation9], %s55
      %s57 = sshll.u32 [#allocation8], 4
      %s58 = int_to_ptr.vmem [resolvable:$true] %s57
      %63 = dma.hbm_to_vmem [thread:$0]  %s4, 24576, %s58, [#allocation9], 512, 512, 32
    $region21: #{tpu_custom_call.1} parent=1 // pred_fallthru
      _
    // Predicated region
    $region22: #{tpu_custom_call.1} parent=1 // pred_check
      _
    $region23: #{tpu_custom_call.1} parent=1 // pred_check_branch
      %65 = sbr.rel (0) target = $region25
    $region24: #{tpu_custom_call.1} parent=1 // pred_region
      %66 = dma.done [#allocation3], 256
    $region25: #{tpu_custom_call.1} parent=1 // pred_fallthru
      _
    // Predicated region
    $region26: #{tpu_custom_call.1} parent=1 // pred_check
      _
    $region27: #{tpu_custom_call.1} parent=1 // pred_check_branch
      %68 = sbr.rel (0) target = $region29
    $region28: #{tpu_custom_call.1} parent=1 // pred_region
      %69 = dma.done [#allocation6], 64
    $region29: #{tpu_custom_call.1} parent=1 // pred_fallthru
      _
    // Predicated region
    $region30: #{tpu_custom_call.1} parent=1 // pred_check
      _
    $region31: #{tpu_custom_call.1} parent=1 // pred_check_branch
      %71 = sbr.rel (0) target = $region33
    $region32: #{tpu_custom_call.1} parent=1 // pred_region
      %72 = dma.done [#allocation6], 2048
    $region33: #{tpu_custom_call.1} parent=1 // pred_fallthru
      _
    // Predicated region
    $region34: #{tpu_custom_call.1} parent=1 // pred_check
      _
    $region35: #{tpu_custom_call.1} parent=1 // pred_check_branch
      %74 = sbr.rel (0) target = $region37
    $region36: #{tpu_custom_call.1} parent=1 // pred_region
      %75 = dma.done [#allocation9], 24576
    $region37: #{tpu_custom_call.1} parent=1 // pred_fallthru
      _
    %v78 = vld [vmem:[#allocation5] sm:$0x3]
    %v79 = vld [vmem:[#allocation5 + $0x2] sm:$0x3]
    %v80 = vld [vmem:[#allocation7] sm:$0xff]
    %v81 = vld [vmem:[#allocation7 + $0x8] sm:$0xff]
    %v82 = vld [vmem:[#allocation7 + $0x10] sm:$0xff]
    %v83 = vld [vmem:[#allocation7 + $0x18] sm:$0xff]
    %v84 = vld [vmem:[#allocation7 + $0x20] sm:$0xff]
    %v85 = vld [vmem:[#allocation7 + $0x28] sm:$0xff]
    %v86 = vld [vmem:[#allocation7 + $0x30] sm:$0xff]
    %v87 = vld [vmem:[#allocation7 + $0x38] sm:$0xff]
    %v88 = vld [vmem:[#allocation7 + $0x40] sm:$0xff]
    %v89 = vld [vmem:[#allocation7 + $0x48] sm:$0xff]
    %v90 = vld [vmem:[#allocation7 + $0x50] sm:$0xff]
    %v91 = vld [vmem:[#allocation7 + $0x58] sm:$0xff]
    %v92 = vld [vmem:[#allocation7 + $0x60] sm:$0xff]
    %v93 = vld [vmem:[#allocation7 + $0x68] sm:$0xff]
    %v94 = vld [vmem:[#allocation7 + $0x70] sm:$0xff]
    %v95 = vld [vmem:[#allocation7 + $0x78] sm:$0xff]
    %v98 = vcombine.low %v78, %v79
    %v100 = vunpack.c.l.s4 1983009808
    %v101 = vunpack.c.0.s8 %v100
    %v102 = vlaneseq
    %v103 = vshrl.u32 %v102, 7
    %v104 = vsub.s32 %v101, %v103
    %v105 = vrot.slane %v98, %v104
    %v122 = vunpack.c.l.b16 %v80
    %v123 = vunpack.c.h.b16 %v80
    %v124 = vunpack.c.l.b16 %v81
    %v125 = vunpack.c.h.b16 %v81
    %v126 = vunpack.c.l.b16 %v82
    %v127 = vunpack.c.h.b16 %v82
    %v128 = vunpack.c.l.b16 %v83
    %v129 = vunpack.c.h.b16 %v83
    %v130 = vunpack.c.l.b16 %v84
    %v131 = vunpack.c.h.b16 %v84
    %v132 = vunpack.c.l.b16 %v85
    %v133 = vunpack.c.h.b16 %v85
    %v134 = vunpack.c.l.b16 %v86
    %v135 = vunpack.c.h.b16 %v86
    %v136 = vunpack.c.l.b16 %v87
    %v137 = vunpack.c.h.b16 %v87
    %v138 = vunpack.c.l.b16 %v88
    %v139 = vunpack.c.h.b16 %v88
    %v140 = vunpack.c.l.b16 %v89
    %v141 = vunpack.c.h.b16 %v89
    %v142 = vunpack.c.l.b16 %v90
    %v143 = vunpack.c.h.b16 %v90
    %v144 = vunpack.c.l.b16 %v91
    %v145 = vunpack.c.h.b16 %v91
    %v146 = vunpack.c.l.b16 %v92
    %v147 = vunpack.c.h.b16 %v92
    %v148 = vunpack.c.l.b16 %v93
    %v149 = vunpack.c.h.b16 %v93
    %v150 = vunpack.c.l.b16 %v94
    %v151 = vunpack.c.h.b16 %v94
    %v152 = vunpack.c.l.b16 %v95
    %v153 = vunpack.c.h.b16 %v95
    %v154 = vpack.c.b16 %v126, %v122
    %v155 = vpack.c.b16 %v127, %v123
    %v156 = vpack.c.b16 %v128, %v124
    %v157 = vpack.c.b16 %v129, %v125
    %v158 = vpack.c.b16 %v134, %v130
    %v159 = vpack.c.b16 %v135, %v131
    %v160 = vpack.c.b16 %v136, %v132
    %v161 = vpack.c.b16 %v137, %v133
    %v162 = vpack.c.b16 %v142, %v138
    %v163 = vpack.c.b16 %v143, %v139
    %v164 = vpack.c.b16 %v144, %v140
    %v165 = vpack.c.b16 %v145, %v141
    %v166 = vpack.c.b16 %v150, %v146
    %v167 = vpack.c.b16 %v151, %v147
    %v168 = vpack.c.b16 %v152, %v148
    %v169 = vpack.c.b16 %v153, %v149
    %vm186 = vcmask 523264
    %v188 = vsel %vm186, %v105, 0
    %190 = vmatprep.subr.bf16.mxu0 %v155
    %191 = vmatpush1.bf16.msra.mxu0 %v154
    %192 = vmatprep.subr.bf16.mxu0 %v159
    %193 = vmatpush1.bf16.msra.mxu0 %v158
    %194 = vmatprep.subr.bf16.mxu0 %v163
    %195 = vmatpush1.bf16.msra.mxu0 %v162
    %196 = vmatprep.subr.bf16.mxu0 %v167
    %197 = vmatpush1.bf16.msra.mxu0 %v166
    %198 = vmatprep.subr.bf16.mxu0 0
    %199 = vmatpush1.bf16.msra.mxu0 0
    %200 = vmatprep.subr.bf16.mxu0 0
    %201 = vmatpush1.bf16.msra.mxu0 0
    %202 = vmatprep.subr.bf16.mxu0 0
    %203 = vmatpush1.bf16.msra.mxu0 0
    %204 = vmatprep.subr.bf16.mxu0 0
    %205 = vmatpush1.bf16.msra.mxu0 0
    %206 = vmatprep.subr.bf16.mxu0 0
    %207 = vmatpush1.bf16.msra.mxu0 0
    %208 = vmatprep.subr.bf16.mxu0 0
    %209 = vmatpush1.bf16.msra.mxu0 0
    %210 = vmatprep.subr.bf16.mxu0 0
    %211 = vmatpush1.bf16.msra.mxu0 0
    %212 = vmatprep.subr.bf16.mxu0 0
    %213 = vmatpush1.bf16.msra.mxu0 0
    %214 = vmatprep.subr.bf16.mxu0 0
    %215 = vmatpush1.bf16.msra.mxu0 0
    %216 = vmatprep.subr.bf16.mxu0 0
    %217 = vmatpush1.bf16.msra.mxu0 0
    %218 = vmatprep.subr.bf16.mxu0 0
    %219 = vmatpush1.bf16.msra.mxu0 0
    %220 = vmatprep.subr.bf16.mxu0 0
    %221 = vmatpush1.bf16.msra.mxu0 0
    %222 = vmatprep.mubr.bf16.mxu0 0
    %223 = vmatmul.mubr.bf16.gmra.mrb[0].mxu0 %v188
    %v224 = vpop.f32.mrb[0].mxu0
    %v225 = vadd.f32 0.0, %v224
    %v226 = vpop.f32.mrb[0].mxu0
    %v227 = vadd.f32 0.0, %v226
    %v228 = vpop.f32.mrb[0].mxu0
    %v229 = vpop.f32.mrb[0].mxu0
    %230 = vdwg.mxu0
    %231 = vmatprep.subr.bf16.mxu0 %v157
    %232 = vmatpush1.bf16.msra.mxu0 %v156
    %233 = vmatprep.subr.bf16.mxu0 %v161
    %234 = vmatpush1.bf16.msra.mxu0 %v160
    %235 = vmatprep.subr.bf16.mxu0 %v165
    %236 = vmatpush1.bf16.msra.mxu0 %v164
    %237 = vmatprep.subr.bf16.mxu0 %v169
    %238 = vmatpush1.bf16.msra.mxu0 %v168
    %239 = vmatprep.subr.bf16.mxu0 0
    %240 = vmatpush1.bf16.msra.mxu0 0
    %241 = vmatprep.subr.bf16.mxu0 0
    %242 = vmatpush1.bf16.msra.mxu0 0
    %243 = vmatprep.subr.bf16.mxu0 0
    %244 = vmatpush1.bf16.msra.mxu0 0
    %245 = vmatprep.subr.bf16.mxu0 0
    %246 = vmatpush1.bf16.msra.mxu0 0
    %247 = vmatprep.subr.bf16.mxu0 0
    %248 = vmatpush1.bf16.msra.mxu0 0
    %249 = vmatprep.subr.bf16.mxu0 0
    %250 = vmatpush1.bf16.msra.mxu0 0
    %251 = vmatprep.subr.bf16.mxu0 0
    %252 = vmatpush1.bf16.msra.mxu0 0
    %253 = vmatprep.subr.bf16.mxu0 0
    %254 = vmatpush1.bf16.msra.mxu0 0
    %255 = vmatprep.subr.bf16.mxu0 0
    %256 = vmatpush1.bf16.msra.mxu0 0
    %257 = vmatprep.subr.bf16.mxu0 0
    %258 = vmatpush1.bf16.msra.mxu0 0
    %259 = vmatprep.subr.bf16.mxu0 0
    %260 = vmatpush1.bf16.msra.mxu0 0
    %261 = vmatprep.subr.bf16.mxu0 0
    %262 = vmatpush1.bf16.msra.mxu0 0
    %263 = vmatprep.mubr.bf16.mxu0 0
    %264 = vmatmul.mubr.bf16.gmra.mrb[0].mxu0 %v188
    %v265 = vpop.f32.mrb[0].mxu0
    %v266 = vadd.f32 0.0, %v265
    %v267 = vpop.f32.mrb[0].mxu0
    %v268 = vadd.f32 0.0, %v267
    %v269 = vpop.f32.mrb[0].mxu0
    %v270 = vpop.f32.mrb[0].mxu0
    %271 = vdwg.mxu0
    %v272 = vpack.c.bf16 %v225, %v225
    %v273 = vpack.c.bf16 %v227, %v227
    %v274 = vpack.c.bf16 %v266, %v266
    %v275 = vpack.c.bf16 %v268, %v268
    %v280 = vcombine.low %v272, %v273
    %v281 = vcombine.low %v274, %v275
    %v283 = vunpack.c.l.s4 1983009808
    %v284 = vunpack.c.0.s8 %v283
    %v285 = vlaneseq
    %v286 = vshrl.u32 %v285, 7
    %v287 = vsub.s32 %v284, %v286
    %v288 = vrot.slane %v280, %v287
    %v290 = vunpack.c.l.s4 1983009808
    %v291 = vunpack.c.0.s8 %v290
    %v292 = vlaneseq
    %v293 = vshrl.u32 %v292, 7
    %v294 = vsub.s32 %v291, %v293
    %v295 = vrot.slane %v281, %v294
    %v296 = vcombine.low %v288, %v295
    %v297 = vcombine.high %v288, %v295
    %v298 = vld [vmem:[#allocation2] sm:$0xff]
    %v299 = vld [vmem:[#allocation2 + $0x8] sm:$0xff]
    %v302 = vcombine.high %v298, %v298
    %v304 = vunpack.c.l.s4 1983009808
    %v305 = vunpack.c.0.s8 %v304
    %v306 = vlaneseq
    %v307 = vshrl.u32 %v306, 7
    %v308 = vsub.s32 %v305, %v307
    %v309 = vrot.slane %v298, %v308
    %v311 = vunpack.c.l.s4 1983009808
    %v312 = vunpack.c.0.s8 %v311
    %v313 = vlaneseq
    %v314 = vshrl.u32 %v313, 7
    %v315 = vsub.s32 %v312, %v314
    %v316 = vrot.slane %v302, %v315
    %v317 = vcombine.high %v309, %v309
    %v318 = vcombine.high %v316, %v316
    %v319 = vcombine.high %v299, %v299
    %v321 = vunpack.c.l.s4 1983009808
    %v322 = vunpack.c.0.s8 %v321
    %v323 = vlaneseq
    %v324 = vshrl.u32 %v323, 7
    %v325 = vsub.s32 %v322, %v324
    %v326 = vrot.slane %v299, %v325
    %v328 = vunpack.c.l.s4 1983009808
    %v329 = vunpack.c.0.s8 %v328
    %v330 = vlaneseq
    %v331 = vshrl.u32 %v330, 7
    %v332 = vsub.s32 %v329, %v331
    %v333 = vrot.slane %v319, %v332
    %v334 = vcombine.high %v326, %v326
    %v335 = vcombine.high %v333, %v333
    %v336 = vcombine.low %v296, %v296
    %v338 = vunpack.c.l.s4 1983009808
    %v339 = vunpack.c.0.s8 %v338
    %v340 = vlaneseq
    %v341 = vshrl.u32 %v340, 7
    %v342 = vsub.s32 %v339, %v341
    %v343 = vrot.slane %v336, %v342
    %v345 = vunpack.c.l.s4 1983009808
    %v346 = vunpack.c.0.s8 %v345
    %v347 = vlaneseq
    %v348 = vshrl.u32 %v347, 7
    %v349 = vsub.s32 %v346, %v348
    %v350 = vrot.slane %v296, %v349
    %v351 = vcombine.high %v343, %v343
    %v352 = vcombine.high %v350, %v350
    %v353 = vcombine.low %v297, %v297
    %v355 = vunpack.c.l.s4 1983009808
    %v356 = vunpack.c.0.s8 %v355
    %v357 = vlaneseq
    %v358 = vshrl.u32 %v357, 7
    %v359 = vsub.s32 %v356, %v358
    %v360 = vrot.slane %v353, %v359
    %v362 = vunpack.c.l.s4 1983009808
    %v363 = vunpack.c.0.s8 %v362
    %v364 = vlaneseq
    %v365 = vshrl.u32 %v364, 7
    %v366 = vsub.s32 %v363, %v365
    %v367 = vrot.slane %v297, %v366
    %v368 = vcombine.high %v360, %v360
    %v369 = vcombine.high %v367, %v367
    %vm370 = vcmask 1041408
    %v373 = vsel %vm370, %v309, %v343
    %v376 = vsel %vm370, %v317, %v351
    %v379 = vsel %vm370, %v316, %v350
    %v382 = vsel %vm370, %v318, %v352
    %v385 = vsel %vm370, %v326, %v360
    %v388 = vsel %vm370, %v334, %v368
    %v391 = vsel %vm370, %v333, %v367
    %v394 = vsel %vm370, %v335, %v369
    %v403 = vrot.slane %v373, 4
    %v404 = vrot.slane %v376, 4
    %v405 = vrot.slane %v379, 4
    %v406 = vrot.slane %v382, 4
    %v407 = vrot.slane %v385, 4
    %v408 = vrot.slane %v388, 4
    %v409 = vrot.slane %v391, 4
    %v410 = vrot.slane %v394, 4
    %411 = vrot.lane.b32.xlu0 %v403, 127
    %v412 = vpop.permute.xlu0 %411
    %413 = vrot.lane.b32.xlu0 %v404, 127
    %v414 = vpop.permute.xlu0 %413
    %415 = vrot.lane.b32.xlu0 %v405, 127
    %v416 = vpop.permute.xlu0 %415
    %417 = vrot.lane.b32.xlu0 %v406, 127
    %v418 = vpop.permute.xlu0 %417
    %419 = vrot.lane.b32.xlu0 %v407, 127
    %v420 = vpop.permute.xlu0 %419
    %421 = vrot.lane.b32.xlu0 %v408, 127
    %v422 = vpop.permute.xlu0 %421
    %423 = vrot.lane.b32.xlu0 %v409, 127
    %v424 = vpop.permute.xlu0 %423
    %425 = vrot.lane.b32.xlu0 %v410, 127
    %v426 = vpop.permute.xlu0 %425
    %vm427 = vcmask 1039360
    %v428 = vsel %vm427, %v412, %v414
    %v429 = vsel %vm427, %v414, %v416
    %v430 = vsel %vm427, %v416, %v418
    %v431 = vsel %vm427, %v420, %v422
    %v432 = vsel %vm427, %v422, %v424
    %v433 = vsel %vm427, %v424, %v426
    %434 = vrot.lane.b32.xlu0 %v373, 126
    %v435 = vpop.permute.xlu0 %434
    %436 = vrot.lane.b32.xlu0 %v376, 126
    %v437 = vpop.permute.xlu0 %436
    %438 = vrot.lane.b32.xlu0 %v379, 126
    %v439 = vpop.permute.xlu0 %438
    %440 = vrot.lane.b32.xlu0 %v382, 126
    %v441 = vpop.permute.xlu0 %440
    %442 = vrot.lane.b32.xlu0 %v385, 126
    %v443 = vpop.permute.xlu0 %442
    %444 = vrot.lane.b32.xlu0 %v388, 126
    %v445 = vpop.permute.xlu0 %444
    %446 = vrot.lane.b32.xlu0 %v391, 126
    %v447 = vpop.permute.xlu0 %446
    %448 = vrot.lane.b32.xlu0 %v394, 126
    %v449 = vpop.permute.xlu0 %448
    %vm450 = vcmask 1031168
    %v451 = vsel %vm450, %v435, %v437
    %v452 = vsel %vm450, %v437, %v439
    %v453 = vsel %vm450, %v439, %v441
    %v454 = vsel %vm450, %v443, %v445
    %v455 = vsel %vm450, %v445, %v447
    %v456 = vsel %vm450, %v447, %v449
    %457 = vrot.lane.b32.xlu0 %v403, 110
    %v458 = vpop.permute.xlu0 %457
    %459 = vrot.lane.b32.xlu0 %v404, 110
    %v460 = vpop.permute.xlu0 %459
    %461 = vrot.lane.b32.xlu0 %v405, 110
    %v462 = vpop.permute.xlu0 %461
    %463 = vrot.lane.b32.xlu0 %v406, 110
    %v464 = vpop.permute.xlu0 %463
    %465 = vrot.lane.b32.xlu0 %v407, 110
    %v466 = vpop.permute.xlu0 %465
    %467 = vrot.lane.b32.xlu0 %v408, 110
    %v468 = vpop.permute.xlu0 %467
    %469 = vrot.lane.b32.xlu0 %v409, 110
    %v470 = vpop.permute.xlu0 %469
    %471 = vrot.lane.b32.xlu0 %v410, 110
    %v472 = vpop.permute.xlu0 %471
    %vm473 = vcmask 900096
    %v474 = vsel %vm473, %v458, %v460
    %v475 = vsel %vm473, %v460, %v462
    %v476 = vsel %vm473, %v462, %v464
    %v477 = vsel %vm473, %v466, %v468
    %v478 = vsel %vm473, %v468, %v470
    %v479 = vsel %vm473, %v470, %v472
    %480 = vrot.lane.b32.xlu0 %v373, 109
    %v481 = vpop.permute.xlu0 %480
    %482 = vrot.lane.b32.xlu0 %v376, 109
    %v483 = vpop.permute.xlu0 %482
    %484 = vrot.lane.b32.xlu0 %v379, 109
    %v485 = vpop.permute.xlu0 %484
    %486 = vrot.lane.b32.xlu0 %v382, 109
    %v487 = vpop.permute.xlu0 %486
    %488 = vrot.lane.b32.xlu0 %v385, 109
    %v489 = vpop.permute.xlu0 %488
    %490 = vrot.lane.b32.xlu0 %v388, 109
    %v491 = vpop.permute.xlu0 %490
    %492 = vrot.lane.b32.xlu0 %v391, 109
    %v493 = vpop.permute.xlu0 %492
    %494 = vrot.lane.b32.xlu0 %v394, 109
    %v495 = vpop.permute.xlu0 %494
    %vm496 = vcmask 891904
    %v497 = vsel %vm496, %v481, %v483
    %v498 = vsel %vm496, %v483, %v485
    %v499 = vsel %vm496, %v485, %v487
    %v500 = vsel %vm496, %v489, %v491
    %v501 = vsel %vm496, %v491, %v493
    %v502 = vsel %vm496, %v493, %v495
    %503 = vrot.lane.b32.xlu0 %v403, 108
    %v504 = vpop.permute.xlu0 %503
    %505 = vrot.lane.b32.xlu0 %v404, 108
    %v506 = vpop.permute.xlu0 %505
    %507 = vrot.lane.b32.xlu0 %v405, 108
    %v508 = vpop.permute.xlu0 %507
    %509 = vrot.lane.b32.xlu0 %v406, 108
    %v510 = vpop.permute.xlu0 %509
    %511 = vrot.lane.b32.xlu0 %v407, 108
    %v512 = vpop.permute.xlu0 %511
    %513 = vrot.lane.b32.xlu0 %v408, 108
    %v514 = vpop.permute.xlu0 %513
    %515 = vrot.lane.b32.xlu0 %v409, 108
    %v516 = vpop.permute.xlu0 %515
    %517 = vrot.lane.b32.xlu0 %v410, 108
    %v518 = vpop.permute.xlu0 %517
    %vm519 = vcmask 883712
    %v520 = vsel %vm519, %v504, %v506
    %v521 = vsel %vm519, %v506, %v508
    %v522 = vsel %vm519, %v508, %v510
    %v523 = vsel %vm519, %v512, %v514
    %v524 = vsel %vm519, %v514, %v516
    %v525 = vsel %vm519, %v516, %v518
    %526 = vrot.lane.b32.xlu0 %v373, 92
    %v527 = vpop.permute.xlu0 %526
    %528 = vrot.lane.b32.xlu0 %v376, 92
    %v529 = vpop.permute.xlu0 %528
    %530 = vrot.lane.b32.xlu0 %v379, 92
    %v531 = vpop.permute.xlu0 %530
    %532 = vrot.lane.b32.xlu0 %v382, 92
    %v533 = vpop.permute.xlu0 %532
    %534 = vrot.lane.b32.xlu0 %v385, 92
    %v535 = vpop.permute.xlu0 %534
    %536 = vrot.lane.b32.xlu0 %v388, 92
    %v537 = vpop.permute.xlu0 %536
    %538 = vrot.lane.b32.xlu0 %v391, 92
    %v539 = vpop.permute.xlu0 %538
    %540 = vrot.lane.b32.xlu0 %v394, 92
    %v541 = vpop.permute.xlu0 %540
    %vm542 = vcmask 752640
    %v543 = vsel %vm542, %v527, %v529
    %v544 = vsel %vm542, %v529, %v531
    %v545 = vsel %vm542, %v531, %v533
    %v546 = vsel %vm542, %v535, %v537
    %v547 = vsel %vm542, %v537, %v539
    %v548 = vsel %vm542, %v539, %v541
    %549 = vrot.lane.b32.xlu0 %v403, 91
    %v550 = vpop.permute.xlu0 %549
    %551 = vrot.lane.b32.xlu0 %v404, 91
    %v552 = vpop.permute.xlu0 %551
    %553 = vrot.lane.b32.xlu0 %v405, 91
    %v554 = vpop.permute.xlu0 %553
    %555 = vrot.lane.b32.xlu0 %v406, 91
    %v556 = vpop.permute.xlu0 %555
    %557 = vrot.lane.b32.xlu0 %v407, 91
    %v558 = vpop.permute.xlu0 %557
    %559 = vrot.lane.b32.xlu0 %v408, 91
    %v560 = vpop.permute.xlu0 %559
    %561 = vrot.lane.b32.xlu0 %v409, 91
    %v562 = vpop.permute.xlu0 %561
    %563 = vrot.lane.b32.xlu0 %v410, 91
    %v564 = vpop.permute.xlu0 %563
    %vm565 = vcmask 744448
    %v566 = vsel %vm565, %v550, %v552
    %v567 = vsel %vm565, %v552, %v554
    %v568 = vsel %vm565, %v554, %v556
    %v569 = vsel %vm565, %v558, %v560
    %v570 = vsel %vm565, %v560, %v562
    %v571 = vsel %vm565, %v562, %v564
    %572 = vrot.lane.b32.xlu0 %v373, 90
    %v573 = vpop.permute.xlu0 %572
    %574 = vrot.lane.b32.xlu0 %v376, 90
    %v575 = vpop.permute.xlu0 %574
    %576 = vrot.lane.b32.xlu0 %v379, 90
    %v577 = vpop.permute.xlu0 %576
    %578 = vrot.lane.b32.xlu0 %v382, 90
    %v579 = vpop.permute.xlu0 %578
    %580 = vrot.lane.b32.xlu0 %v385, 90
    %v581 = vpop.permute.xlu0 %580
    %582 = vrot.lane.b32.xlu0 %v388, 90
    %v583 = vpop.permute.xlu0 %582
    %584 = vrot.lane.b32.xlu0 %v391, 90
    %v585 = vpop.permute.xlu0 %584
    %586 = vrot.lane.b32.xlu0 %v394, 90
    %v587 = vpop.permute.xlu0 %586
    %vm588 = vcmask 736256
    %v589 = vsel %vm588, %v573, %v575
    %v590 = vsel %vm588, %v575, %v577
    %v591 = vsel %vm588, %v577, %v579
    %v592 = vsel %vm588, %v581, %v583
    %v593 = vsel %vm588, %v583, %v585
    %v594 = vsel %vm588, %v585, %v587
    %vm595 = vcmask 1043456
    %v597 = vsel %vm595, %v373, %v428
    %v600 = vsel %vm595, %v376, %v429
    %v603 = vsel %vm595, %v379, %v430
    %v606 = vsel %vm595, %v385, %v431
    %v609 = vsel %vm595, %v388, %v432
    %v612 = vsel %vm595, %v391, %v433
    %v616 = vsel %vm595, %v451, %v474
    %v620 = vsel %vm595, %v452, %v475
    %v624 = vsel %vm595, %v453, %v476
    %v628 = vsel %vm595, %v454, %v477
    %v632 = vsel %vm595, %v455, %v478
    %v636 = vsel %vm595, %v456, %v479
    %v640 = vsel %vm595, %v497, %v520
    %v644 = vsel %vm595, %v498, %v521
    %v648 = vsel %vm595, %v499, %v522
    %v652 = vsel %vm595, %v500, %v523
    %v656 = vsel %vm595, %v501, %v524
    %v660 = vsel %vm595, %v502, %v525
    %v664 = vsel %vm595, %v543, %v566
    %v668 = vsel %vm595, %v544, %v567
    %v672 = vsel %vm595, %v545, %v568
    %v676 = vsel %vm595, %v546, %v569
    %v680 = vsel %vm595, %v547, %v570
    %v684 = vsel %vm595, %v548, %v571
    %v688 = vsel %vm595, %v589, 1065369472
    %v690 = vsel %vm595, %v590, 1065369472
    %v692 = vsel %vm595, %v591, 1065369472
    %v694 = vsel %vm595, %v592, 1065369472
    %v696 = vsel %vm595, %v593, 1065369472
    %v698 = vsel %vm595, %v594, 1065369472
    %v699 = vld [vmem:[%s3] sm:$0xf]
    %vm700 = vcmask 596992
    %v702 = vsel %vm700, %v699, 0
    %vm704 = vcmask 1044480
    %v705 = vsel %vm595, 4294967295, 65535
    %v706 = vsel %vm704, %v705, 0
    %v707 = vand.u32 %v688, %v706
    %v709 = vand.u32 %v690, %v706
    %v711 = vand.u32 %v692, %v706
    %713 = vmatprep.subr.bf16.mxu0 %v600
    %714 = vmatpush1.bf16.msra.mxu0 %v597
    %715 = vmatprep.subr.bf16.mxu0 %v620
    %716 = vmatpush1.bf16.msra.mxu0 %v616
    %717 = vmatprep.subr.bf16.mxu0 %v644
    %718 = vmatpush1.bf16.msra.mxu0 %v640
    %719 = vmatprep.subr.bf16.mxu0 %v668
    %720 = vmatpush1.bf16.msra.mxu0 %v664
    %721 = vmatprep.subr.bf16.mxu0 %v709
    %722 = vmatpush1.bf16.msra.mxu0 %v707
    %723 = vmatprep.subr.bf16.mxu0 0
    %724 = vmatpush1.bf16.msra.mxu0 0
    %725 = vmatprep.subr.bf16.mxu0 0
    %726 = vmatpush1.bf16.msra.mxu0 0
    %727 = vmatprep.subr.bf16.mxu0 0
    %728 = vmatpush1.bf16.msra.mxu0 0
    %729 = vmatprep.subr.bf16.mxu0 0
    %730 = vmatpush1.bf16.msra.mxu0 0
    %731 = vmatprep.subr.bf16.mxu0 0
    %732 = vmatpush1.bf16.msra.mxu0 0
    %733 = vmatprep.subr.bf16.mxu0 0
    %734 = vmatpush1.bf16.msra.mxu0 0
    %735 = vmatprep.subr.bf16.mxu0 0
    %736 = vmatpush1.bf16.msra.mxu0 0
    %737 = vmatprep.subr.bf16.mxu0 0
    %738 = vmatpush1.bf16.msra.mxu0 0
    %739 = vmatprep.subr.bf16.mxu0 0
    %740 = vmatpush1.bf16.msra.mxu0 0
    %741 = vmatprep.subr.bf16.mxu0 0
    %742 = vmatpush1.bf16.msra.mxu0 0
    %743 = vmatprep.subr.bf16.mxu0 0
    %744 = vmatpush1.bf16.msra.mxu0 0
    %745 = vmatprep.mubr.bf16.mxu0 0
    %746 = vmatmul.mubr.bf16.gmra.mrb[0].mxu0 %v702
    %v747 = vpop.f32.mrb[0].mxu0
    %v748 = vadd.f32 0.0, %v747
    %v749 = vpop.f32.mrb[0].mxu0
    %v750 = vadd.f32 0.0, %v749
    %v751 = vpop.f32.mrb[0].mxu0
    %v752 = vpop.f32.mrb[0].mxu0
    %753 = vdwg.mxu0
    %754 = vmatprep.subr.bf16.mxu0 0
    %755 = vmatpush1.bf16.msra.mxu0 %v603
    %756 = vmatprep.subr.bf16.mxu0 0
    %757 = vmatpush1.bf16.msra.mxu0 %v624
    %758 = vmatprep.subr.bf16.mxu0 0
    %759 = vmatpush1.bf16.msra.mxu0 %v648
    %760 = vmatprep.subr.bf16.mxu0 0
    %761 = vmatpush1.bf16.msra.mxu0 %v672
    %762 = vmatprep.subr.bf16.mxu0 0
    %763 = vmatpush1.bf16.msra.mxu0 %v711
    %764 = vmatprep.subr.bf16.mxu0 0
    %765 = vmatpush1.bf16.msra.mxu0 0
    %766 = vmatprep.subr.bf16.mxu0 0
    %767 = vmatpush1.bf16.msra.mxu0 0
    %768 = vmatprep.subr.bf16.mxu0 0
    %769 = vmatpush1.bf16.msra.mxu0 0
    %770 = vmatprep.subr.bf16.mxu0 0
    %771 = vmatpush1.bf16.msra.mxu0 0
    %772 = vmatprep.subr.bf16.mxu0 0
    %773 = vmatpush1.bf16.msra.mxu0 0
    %774 = vmatprep.subr.bf16.mxu0 0
    %775 = vmatpush1.bf16.msra.mxu0 0
    %776 = vmatprep.subr.bf16.mxu0 0
    %777 = vmatpush1.bf16.msra.mxu0 0
    %778 = vmatprep.subr.bf16.mxu0 0
    %779 = vmatpush1.bf16.msra.mxu0 0
    %780 = vmatprep.subr.bf16.mxu0 0
    %781 = vmatpush1.bf16.msra.mxu0 0
    %782 = vmatprep.subr.bf16.mxu0 0
    %783 = vmatpush1.bf16.msra.mxu0 0
    %784 = vmatprep.subr.bf16.mxu0 0
    %785 = vmatpush1.bf16.msra.mxu0 0
    %786 = vmatprep.mubr.bf16.mxu0 0
    %787 = vmatmul.mubr.bf16.gmra.mrb[0].mxu0 %v702
    %v788 = vpop.f32.mrb[0].mxu0
    %v789 = vadd.f32 0.0, %v788
    %v790 = vpop.f32.mrb[0].mxu0
    %v791 = vpop.f32.mrb[0].mxu0
    %v792 = vpop.f32.mrb[0].mxu0
    %793 = vdwg.mxu0
    %v794 = vand.u32 %v694, %v706
    %v796 = vand.u32 %v696, %v706
    %v798 = vand.u32 %v698, %v706
    %800 = vmatprep.subr.bf16.mxu0 %v609
    %801 = vmatpush1.bf16.msra.mxu0 %v606
    %802 = vmatprep.subr.bf16.mxu0 %v632
    %803 = vmatpush1.bf16.msra.mxu0 %v628
    %804 = vmatprep.subr.bf16.mxu0 %v656
    %805 = vmatpush1.bf16.msra.mxu0 %v652
    %806 = vmatprep.subr.bf16.mxu0 %v680
    %807 = vmatpush1.bf16.msra.mxu0 %v676
    %808 = vmatprep.subr.bf16.mxu0 %v796
    %809 = vmatpush1.bf16.msra.mxu0 %v794
    %810 = vmatprep.subr.bf16.mxu0 0
    %811 = vmatpush1.bf16.msra.mxu0 0
    %812 = vmatprep.subr.bf16.mxu0 0
    %813 = vmatpush1.bf16.msra.mxu0 0
    %814 = vmatprep.subr.bf16.mxu0 0
    %815 = vmatpush1.bf16.msra.mxu0 0
    %816 = vmatprep.subr.bf16.mxu0 0
    %817 = vmatpush1.bf16.msra.mxu0 0
    %818 = vmatprep.subr.bf16.mxu0 0
    %819 = vmatpush1.bf16.msra.mxu0 0
    %820 = vmatprep.subr.bf16.mxu0 0
    %821 = vmatpush1.bf16.msra.mxu0 0
    %822 = vmatprep.subr.bf16.mxu0 0
    %823 = vmatpush1.bf16.msra.mxu0 0
    %824 = vmatprep.subr.bf16.mxu0 0
    %825 = vmatpush1.bf16.msra.mxu0 0
    %826 = vmatprep.subr.bf16.mxu0 0
    %827 = vmatpush1.bf16.msra.mxu0 0
    %828 = vmatprep.subr.bf16.mxu0 0
    %829 = vmatpush1.bf16.msra.mxu0 0
    %830 = vmatprep.subr.bf16.mxu0 0
    %831 = vmatpush1.bf16.msra.mxu0 0
    %832 = vmatprep.mubr.bf16.mxu0 0
    %833 = vmatmul.mubr.bf16.gmra.mrb[0].mxu0 %v702
    %v834 = vpop.f32.mrb[0].mxu0
    %v835 = vadd.f32 0.0, %v834
    %v836 = vpop.f32.mrb[0].mxu0
    %v837 = vadd.f32 0.0, %v836
    %v838 = vpop.f32.mrb[0].mxu0
    %v839 = vpop.f32.mrb[0].mxu0
    %840 = vdwg.mxu0
    %841 = vmatprep.subr.bf16.mxu0 0
    %842 = vmatpush1.bf16.msra.mxu0 %v612
    %843 = vmatprep.subr.bf16.mxu0 0
    %844 = vmatpush1.bf16.msra.mxu0 %v636
    %845 = vmatprep.subr.bf16.mxu0 0
    %846 = vmatpush1.bf16.msra.mxu0 %v660
    %847 = vmatprep.subr.bf16.mxu0 0
    %848 = vmatpush1.bf16.msra.mxu0 %v684
    %849 = vmatprep.subr.bf16.mxu0 0
    %850 = vmatpush1.bf16.msra.mxu0 %v798
    %851 = vmatprep.subr.bf16.mxu0 0
    %852 = vmatpush1.bf16.msra.mxu0 0
    %853 = vmatprep.subr.bf16.mxu0 0
    %854 = vmatpush1.bf16.msra.mxu0 0
    %855 = vmatprep.subr.bf16.mxu0 0
    %856 = vmatpush1.bf16.msra.mxu0 0
    %857 = vmatprep.subr.bf16.mxu0 0
    %858 = vmatpush1.bf16.msra.mxu0 0
    %859 = vmatprep.subr.bf16.mxu0 0
    %860 = vmatpush1.bf16.msra.mxu0 0
    %861 = vmatprep.subr.bf16.mxu0 0
    %862 = vmatpush1.bf16.msra.mxu0 0
    %863 = vmatprep.subr.bf16.mxu0 0
    %864 = vmatpush1.bf16.msra.mxu0 0
    %865 = vmatprep.subr.bf16.mxu0 0
    %866 = vmatpush1.bf16.msra.mxu0 0
    %867 = vmatprep.subr.bf16.mxu0 0
    %868 = vmatpush1.bf16.msra.mxu0 0
    %869 = vmatprep.subr.bf16.mxu0 0
    %870 = vmatpush1.bf16.msra.mxu0 0
    %871 = vmatprep.subr.bf16.mxu0 0
    %872 = vmatpush1.bf16.msra.mxu0 0
    %873 = vmatprep.mubr.bf16.mxu0 0
    %874 = vmatmul.mubr.bf16.gmra.mrb[0].mxu0 %v702
    %v875 = vpop.f32.mrb[0].mxu0
    %v876 = vadd.f32 0.0, %v875
    %v877 = vpop.f32.mrb[0].mxu0
    %v878 = vpop.f32.mrb[0].mxu0
    %v879 = vpop.f32.mrb[0].mxu0
    %880 = vdwg.mxu0
    %v881 = vmax.f32 %v748, 0.0
    %v882 = vmax.f32 %v750, 0.0
    %v883 = vmax.f32 %v789, 0.0
    %v884 = vmax.f32 %v835, 0.0
    %v885 = vmax.f32 %v837, 0.0
    %v886 = vmax.f32 %v876, 0.0
    %v887 = vpack.c.bf16 %v884, %v881
    %v888 = vpack.c.bf16 %v885, %v882
    %v889 = vpack.c.bf16 %v886, %v883
    %v890 = vld [vmem:[#allocation8] sm:$0xff]
    %v891 = vld [vmem:[#allocation8 + $0x8] sm:$0xff]
    %v892 = vld [vmem:[#allocation8 + $0x10] sm:$0xff]
    %v893 = vld [vmem:[#allocation8 + $0x18] sm:$0xff]
    %v894 = vld [vmem:[#allocation8 + $0x20] sm:$0xff]
    %v895 = vld [vmem:[#allocation8 + $0x28] sm:$0xff]
    %v896 = vld [vmem:[#allocation8 + $0x30] sm:$0xff]
    %v897 = vld [vmem:[#allocation8 + $0x38] sm:$0xff]
    %v898 = vld [vmem:[#allocation8 + $0x40] sm:$0xff]
    %v899 = vld [vmem:[#allocation8 + $0x48] sm:$0xff]
    %v900 = vld [vmem:[#allocation8 + $0x50] sm:$0xff]
    %v901 = vld [vmem:[#allocation8 + $0x58] sm:$0xff]
    %v902 = vld [vmem:[#allocation8 + $0x60] sm:$0xff]
    %v903 = vld [vmem:[#allocation8 + $0x68] sm:$0xff]
    %v904 = vld [vmem:[#allocation8 + $0x70] sm:$0xff]
    %v905 = vld [vmem:[#allocation8 + $0x78] sm:$0xff]
    %v906 = vld [vmem:[#allocation8 + $0x80] sm:$0xff]
    %v907 = vld [vmem:[#allocation8 + $0x88] sm:$0xff]
    %v908 = vld [vmem:[#allocation8 + $0x90] sm:$0xff]
    %v909 = vld [vmem:[#allocation8 + $0x98] sm:$0xff]
    %v910 = vld [vmem:[#allocation8 + $0xa0] sm:$0xff]
    %v911 = vld [vmem:[#allocation8 + $0xa8] sm:$0xff]
    %v912 = vld [vmem:[#allocation8 + $0xb0] sm:$0xff]
    %v913 = vld [vmem:[#allocation8 + $0xb8] sm:$0xff]
    %v914 = vld [vmem:[#allocation8 + $0xc0] sm:$0xff]
    %v915 = vld [vmem:[#allocation8 + $0xc8] sm:$0xff]
    %v916 = vld [vmem:[#allocation8 + $0xd0] sm:$0xff]
    %v917 = vld [vmem:[#allocation8 + $0xd8] sm:$0xff]
    %v918 = vld [vmem:[#allocation8 + $0xe0] sm:$0xff]
    %v919 = vld [vmem:[#allocation8 + $0xe8] sm:$0xff]
    %v920 = vld [vmem:[#allocation8 + $0xf0] sm:$0xff]
    %v921 = vld [vmem:[#allocation8 + $0xf8] sm:$0xff]
    %v922 = vld [vmem:[#allocation8 + $0x100] sm:$0xff]
    %v923 = vld [vmem:[#allocation8 + $0x108] sm:$0xff]
    %v924 = vld [vmem:[#allocation8 + $0x110] sm:$0xff]
    %v925 = vld [vmem:[#allocation8 + $0x118] sm:$0xff]
    %v926 = vld [vmem:[#allocation8 + $0x120] sm:$0xff]
    %v927 = vld [vmem:[#allocation8 + $0x128] sm:$0xff]
    %v928 = vld [vmem:[#allocation8 + $0x130] sm:$0xff]
    %v929 = vld [vmem:[#allocation8 + $0x138] sm:$0xff]
    %v930 = vld [vmem:[#allocation8 + $0x140] sm:$0xff]
    %v931 = vld [vmem:[#allocation8 + $0x148] sm:$0xff]
    %v932 = vld [vmem:[#allocation8 + $0x150] sm:$0xff]
    %v933 = vld [vmem:[#allocation8 + $0x158] sm:$0xff]
    %v934 = vld [vmem:[#allocation8 + $0x160] sm:$0xff]
    %v935 = vld [vmem:[#allocation8 + $0x168] sm:$0xff]
    %v936 = vld [vmem:[#allocation8 + $0x170] sm:$0xff]
    %v937 = vld [vmem:[#allocation8 + $0x178] sm:$0xff]
    %v938 = vld [vmem:[#allocation8 + $0x180] sm:$0xff]
    %v939 = vld [vmem:[#allocation8 + $0x188] sm:$0xff]
    %v940 = vld [vmem:[#allocation8 + $0x190] sm:$0xff]
    %v941 = vld [vmem:[#allocation8 + $0x198] sm:$0xff]
    %v942 = vld [vmem:[#allocation8 + $0x1a0] sm:$0xff]
    %v943 = vld [vmem:[#allocation8 + $0x1a8] sm:$0xff]
    %v944 = vld [vmem:[#allocation8 + $0x1b0] sm:$0xff]
    %v945 = vld [vmem:[#allocation8 + $0x1b8] sm:$0xff]
    %v946 = vld [vmem:[#allocation8 + $0x1c0] sm:$0xff]
    %v947 = vld [vmem:[#allocation8 + $0x1c8] sm:$0xff]
    %v948 = vld [vmem:[#allocation8 + $0x1d0] sm:$0xff]
    %v949 = vld [vmem:[#allocation8 + $0x1d8] sm:$0xff]
    %v950 = vld [vmem:[#allocation8 + $0x1e0] sm:$0xff]
    %v951 = vld [vmem:[#allocation8 + $0x1e8] sm:$0xff]
    %v952 = vld [vmem:[#allocation8 + $0x1f0] sm:$0xff]
    %v953 = vld [vmem:[#allocation8 + $0x1f8] sm:$0xff]
    %v954 = vld [vmem:[#allocation8 + $0x200] sm:$0xff]
    %v955 = vld [vmem:[#allocation8 + $0x208] sm:$0xff]
    %v956 = vld [vmem:[#allocation8 + $0x210] sm:$0xff]
    %v957 = vld [vmem:[#allocation8 + $0x218] sm:$0xff]
    %v958 = vld [vmem:[#allocation8 + $0x220] sm:$0xff]
    %v959 = vld [vmem:[#allocation8 + $0x228] sm:$0xff]
    %v960 = vld [vmem:[#allocation8 + $0x230] sm:$0xff]
    %v961 = vld [vmem:[#allocation8 + $0x238] sm:$0xff]
    %v962 = vld [vmem:[#allocation8 + $0x240] sm:$0xff]
    %v963 = vld [vmem:[#allocation8 + $0x248] sm:$0xff]
    %v964 = vld [vmem:[#allocation8 + $0x250] sm:$0xff]
    %v965 = vld [vmem:[#allocation8 + $0x258] sm:$0xff]
    %v966 = vld [vmem:[#allocation8 + $0x260] sm:$0xff]
    %v967 = vld [vmem:[#allocation8 + $0x268] sm:$0xff]
    %v968 = vld [vmem:[#allocation8 + $0x270] sm:$0xff]
    %v969 = vld [vmem:[#allocation8 + $0x278] sm:$0xff]
    %v970 = vld [vmem:[#allocation8 + $0x280] sm:$0xff]
    %v971 = vld [vmem:[#allocation8 + $0x288] sm:$0xff]
    %v972 = vld [vmem:[#allocation8 + $0x290] sm:$0xff]
    %v973 = vld [vmem:[#allocation8 + $0x298] sm:$0xff]
    %v974 = vld [vmem:[#allocation8 + $0x2a0] sm:$0xff]
    %v975 = vld [vmem:[#allocation8 + $0x2a8] sm:$0xff]
    %v976 = vld [vmem:[#allocation8 + $0x2b0] sm:$0xff]
    %v977 = vld [vmem:[#allocation8 + $0x2b8] sm:$0xff]
    %v978 = vld [vmem:[#allocation8 + $0x2c0] sm:$0xff]
    %v979 = vld [vmem:[#allocation8 + $0x2c8] sm:$0xff]
    %v980 = vld [vmem:[#allocation8 + $0x2d0] sm:$0xff]
    %v981 = vld [vmem:[#allocation8 + $0x2d8] sm:$0xff]
    %v982 = vld [vmem:[#allocation8 + $0x2e0] sm:$0xff]
    %v983 = vld [vmem:[#allocation8 + $0x2e8] sm:$0xff]
    %v984 = vld [vmem:[#allocation8 + $0x2f0] sm:$0xff]
    %v985 = vld [vmem:[#allocation8 + $0x2f8] sm:$0xff]
    %v986 = vld [vmem:[#allocation8 + $0x300] sm:$0xff]
    %v987 = vld [vmem:[#allocation8 + $0x308] sm:$0xff]
    %v988 = vld [vmem:[#allocation8 + $0x310] sm:$0xff]
    %v989 = vld [vmem:[#allocation8 + $0x318] sm:$0xff]
    %v990 = vld [vmem:[#allocation8 + $0x320] sm:$0xff]
    %v991 = vld [vmem:[#allocation8 + $0x328] sm:$0xff]
    %v992 = vld [vmem:[#allocation8 + $0x330] sm:$0xff]
    %v993 = vld [vmem:[#allocation8 + $0x338] sm:$0xff]
    %v994 = vld [vmem:[#allocation8 + $0x340] sm:$0xff]
    %v995 = vld [vmem:[#allocation8 + $0x348] sm:$0xff]
    %v996 = vld [vmem:[#allocation8 + $0x350] sm:$0xff]
    %v997 = vld [vmem:[#allocation8 + $0x358] sm:$0xff]
    %v998 = vld [vmem:[#allocation8 + $0x360] sm:$0xff]
    %v999 = vld [vmem:[#allocation8 + $0x368] sm:$0xff]
    %v1000 = vld [vmem:[#allocation8 + $0x370] sm:$0xff]
    %v1001 = vld [vmem:[#allocation8 + $0x378] sm:$0xff]
    %v1002 = vld [vmem:[#allocation8 + $0x380] sm:$0xff]
    %v1003 = vld [vmem:[#allocation8 + $0x388] sm:$0xff]
    %v1004 = vld [vmem:[#allocation8 + $0x390] sm:$0xff]
    %v1005 = vld [vmem:[#allocation8 + $0x398] sm:$0xff]
    %v1006 = vld [vmem:[#allocation8 + $0x3a0] sm:$0xff]
    %v1007 = vld [vmem:[#allocation8 + $0x3a8] sm:$0xff]
    %v1008 = vld [vmem:[#allocation8 + $0x3b0] sm:$0xff]
    %v1009 = vld [vmem:[#allocation8 + $0x3b8] sm:$0xff]
    %v1010 = vld [vmem:[#allocation8 + $0x3c0] sm:$0xff]
    %v1011 = vld [vmem:[#allocation8 + $0x3c8] sm:$0xff]
    %v1012 = vld [vmem:[#allocation8 + $0x3d0] sm:$0xff]
    %v1013 = vld [vmem:[#allocation8 + $0x3d8] sm:$0xff]
    %v1014 = vld [vmem:[#allocation8 + $0x3e0] sm:$0xff]
    %v1015 = vld [vmem:[#allocation8 + $0x3e8] sm:$0xff]
    %v1016 = vld [vmem:[#allocation8 + $0x3f0] sm:$0xff]
    %v1017 = vld [vmem:[#allocation8 + $0x3f8] sm:$0xff]
    %v1018 = vld [vmem:[#allocation8 + $0x400] sm:$0xff]
    %v1019 = vld [vmem:[#allocation8 + $0x408] sm:$0xff]
    %v1020 = vld [vmem:[#allocation8 + $0x410] sm:$0xff]
    %v1021 = vld [vmem:[#allocation8 + $0x418] sm:$0xff]
    %v1022 = vld [vmem:[#allocation8 + $0x420] sm:$0xff]
    %v1023 = vld [vmem:[#allocation8 + $0x428] sm:$0xff]
    %v1024 = vld [vmem:[#allocation8 + $0x430] sm:$0xff]
    %v1025 = vld [vmem:[#allocation8 + $0x438] sm:$0xff]
    %v1026 = vld [vmem:[#allocation8 + $0x440] sm:$0xff]
    %v1027 = vld [vmem:[#allocation8 + $0x448] sm:$0xff]
    %v1028 = vld [vmem:[#allocation8 + $0x450] sm:$0xff]
    %v1029 = vld [vmem:[#allocation8 + $0x458] sm:$0xff]
    %v1030 = vld [vmem:[#allocation8 + $0x460] sm:$0xff]
    %v1031 = vld [vmem:[#allocation8 + $0x468] sm:$0xff]
    %v1032 = vld [vmem:[#allocation8 + $0x470] sm:$0xff]
    %v1033 = vld [vmem:[#allocation8 + $0x478] sm:$0xff]
    %v1034 = vld [vmem:[#allocation8 + $0x480] sm:$0xff]
    %v1035 = vld [vmem:[#allocation8 + $0x488] sm:$0xff]
    %v1036 = vld [vmem:[#allocation8 + $0x490] sm:$0xff]
    %v1037 = vld [vmem:[#allocation8 + $0x498] sm:$0xff]
    %v1038 = vld [vmem:[#allocation8 + $0x4a0] sm:$0xff]
    %v1039 = vld [vmem:[#allocation8 + $0x4a8] sm:$0xff]
    %v1040 = vld [vmem:[#allocation8 + $0x4b0] sm:$0xff]
    %v1041 = vld [vmem:[#allocation8 + $0x4b8] sm:$0xff]
    %v1042 = vld [vmem:[#allocation8 + $0x4c0] sm:$0xff]
    %v1043 = vld [vmem:[#allocation8 + $0x4c8] sm:$0xff]
    %v1044 = vld [vmem:[#allocation8 + $0x4d0] sm:$0xff]
    %v1045 = vld [vmem:[#allocation8 + $0x4d8] sm:$0xff]
    %v1046 = vld [vmem:[#allocation8 + $0x4e0] sm:$0xff]
    %v1047 = vld [vmem:[#allocation8 + $0x4e8] sm:$0xff]
    %v1048 = vld [vmem:[#allocation8 + $0x4f0] sm:$0xff]
    %v1049 = vld [vmem:[#allocation8 + $0x4f8] sm:$0xff]
    %v1050 = vld [vmem:[#allocation8 + $0x500] sm:$0xff]
    %v1051 = vld [vmem:[#allocation8 + $0x508] sm:$0xff]
    %v1052 = vld [vmem:[#allocation8 + $0x510] sm:$0xff]
    %v1053 = vld [vmem:[#allocation8 + $0x518] sm:$0xff]
    %v1054 = vld [vmem:[#allocation8 + $0x520] sm:$0xff]
    %v1055 = vld [vmem:[#allocation8 + $0x528] sm:$0xff]
    %v1056 = vld [vmem:[#allocation8 + $0x530] sm:$0xff]
    %v1057 = vld [vmem:[#allocation8 + $0x538] sm:$0xff]
    %v1058 = vld [vmem:[#allocation8 + $0x540] sm:$0xff]
    %v1059 = vld [vmem:[#allocation8 + $0x548] sm:$0xff]
    %v1060 = vld [vmem:[#allocation8 + $0x550] sm:$0xff]
    %v1061 = vld [vmem:[#allocation8 + $0x558] sm:$0xff]
    %v1062 = vld [vmem:[#allocation8 + $0x560] sm:$0xff]
    %v1063 = vld [vmem:[#allocation8 + $0x568] sm:$0xff]
    %v1064 = vld [vmem:[#allocation8 + $0x570] sm:$0xff]
    %v1065 = vld [vmem:[#allocation8 + $0x578] sm:$0xff]
    %v1066 = vld [vmem:[#allocation8 + $0x580] sm:$0xff]
    %v1067 = vld [vmem:[#allocation8 + $0x588] sm:$0xff]
    %v1068 = vld [vmem:[#allocation8 + $0x590] sm:$0xff]
    %v1069 = vld [vmem:[#allocation8 + $0x598] sm:$0xff]
    %v1070 = vld [vmem:[#allocation8 + $0x5a0] sm:$0xff]
    %v1071 = vld [vmem:[#allocation8 + $0x5a8] sm:$0xff]
    %v1072 = vld [vmem:[#allocation8 + $0x5b0] sm:$0xff]
    %v1073 = vld [vmem:[#allocation8 + $0x5b8] sm:$0xff]
    %v1074 = vld [vmem:[#allocation8 + $0x5c0] sm:$0xff]
    %v1075 = vld [vmem:[#allocation8 + $0x5c8] sm:$0xff]
    %v1076 = vld [vmem:[#allocation8 + $0x5d0] sm:$0xff]
    %v1077 = vld [vmem:[#allocation8 + $0x5d8] sm:$0xff]
    %v1078 = vld [vmem:[#allocation8 + $0x5e0] sm:$0xff]
    %v1079 = vld [vmem:[#allocation8 + $0x5e8] sm:$0xff]
    %v1080 = vld [vmem:[#allocation8 + $0x5f0] sm:$0xff]
    %v1081 = vld [vmem:[#allocation8 + $0x5f8] sm:$0xff]
    %v1274 = vunpack.c.l.b16 %v890
    %v1275 = vunpack.c.h.b16 %v890
    %v1276 = vunpack.c.l.b16 %v891
    %v1277 = vunpack.c.h.b16 %v891
    %v1278 = vunpack.c.l.b16 %v892
    %v1279 = vunpack.c.h.b16 %v892
    %v1280 = vunpack.c.l.b16 %v893
    %v1281 = vunpack.c.h.b16 %v893
    %v1282 = vunpack.c.l.b16 %v894
    %v1283 = vunpack.c.h.b16 %v894
    %v1284 = vunpack.c.l.b16 %v895
    %v1285 = vunpack.c.h.b16 %v895
    %v1286 = vunpack.c.l.b16 %v896
    %v1287 = vunpack.c.h.b16 %v896
    %v1288 = vunpack.c.l.b16 %v897
    %v1289 = vunpack.c.h.b16 %v897
    %v1290 = vunpack.c.l.b16 %v898
    %v1291 = vunpack.c.h.b16 %v898
    %v1292 = vunpack.c.l.b16 %v899
    %v1293 = vunpack.c.h.b16 %v899
    %v1294 = vunpack.c.l.b16 %v900
    %v1295 = vunpack.c.h.b16 %v900
    %v1296 = vunpack.c.l.b16 %v901
    %v1297 = vunpack.c.h.b16 %v901
    %v1298 = vunpack.c.l.b16 %v902
    %v1299 = vunpack.c.h.b16 %v902
    %v1300 = vunpack.c.l.b16 %v903
    %v1301 = vunpack.c.h.b16 %v903
    %v1302 = vunpack.c.l.b16 %v904
    %v1303 = vunpack.c.h.b16 %v904
    %v1304 = vunpack.c.l.b16 %v905
    %v1305 = vunpack.c.h.b16 %v905
    %v1306 = vunpack.c.l.b16 %v906
    %v1307 = vunpack.c.h.b16 %v906
    %v1308 = vunpack.c.l.b16 %v907
    %v1309 = vunpack.c.h.b16 %v907
    %v1310 = vunpack.c.l.b16 %v908
    %v1311 = vunpack.c.h.b16 %v908
    %v1312 = vunpack.c.l.b16 %v909
    %v1313 = vunpack.c.h.b16 %v909
    %v1314 = vunpack.c.l.b16 %v910
    %v1315 = vunpack.c.h.b16 %v910
    %v1316 = vunpack.c.l.b16 %v911
    %v1317 = vunpack.c.h.b16 %v911
    %v1318 = vunpack.c.l.b16 %v912
    %v1319 = vunpack.c.h.b16 %v912
    %v1320 = vunpack.c.l.b16 %v913
    %v1321 = vunpack.c.h.b16 %v913
    %v1322 = vunpack.c.l.b16 %v914
    %v1323 = vunpack.c.h.b16 %v914
    %v1324 = vunpack.c.l.b16 %v915
    %v1325 = vunpack.c.h.b16 %v915
    %v1326 = vunpack.c.l.b16 %v916
    %v1327 = vunpack.c.h.b16 %v916
    %v1328 = vunpack.c.l.b16 %v917
    %v1329 = vunpack.c.h.b16 %v917
    %v1330 = vunpack.c.l.b16 %v918
    %v1331 = vunpack.c.h.b16 %v918
    %v1332 = vunpack.c.l.b16 %v919
    %v1333 = vunpack.c.h.b16 %v919
    %v1334 = vunpack.c.l.b16 %v920
    %v1335 = vunpack.c.h.b16 %v920
    %v1336 = vunpack.c.l.b16 %v921
    %v1337 = vunpack.c.h.b16 %v921
    %v1338 = vunpack.c.l.b16 %v922
    %v1339 = vunpack.c.h.b16 %v922
    %v1340 = vunpack.c.l.b16 %v923
    %v1341 = vunpack.c.h.b16 %v923
    %v1342 = vunpack.c.l.b16 %v924
    %v1343 = vunpack.c.h.b16 %v924
    %v1344 = vunpack.c.l.b16 %v925
    %v1345 = vunpack.c.h.b16 %v925
    %v1346 = vunpack.c.l.b16 %v926
    %v1347 = vunpack.c.h.b16 %v926
    %v1348 = vunpack.c.l.b16 %v927
    %v1349 = vunpack.c.h.b16 %v927
    %v1350 = vunpack.c.l.b16 %v928
    %v1351 = vunpack.c.h.b16 %v928
    %v1352 = vunpack.c.l.b16 %v929
    %v1353 = vunpack.c.h.b16 %v929
    %v1354 = vunpack.c.l.b16 %v930
    %v1355 = vunpack.c.h.b16 %v930
    %v1356 = vunpack.c.l.b16 %v931
    %v1357 = vunpack.c.h.b16 %v931
    %v1358 = vunpack.c.l.b16 %v932
    %v1359 = vunpack.c.h.b16 %v932
    %v1360 = vunpack.c.l.b16 %v933
    %v1361 = vunpack.c.h.b16 %v933
    %v1362 = vunpack.c.l.b16 %v934
    %v1363 = vunpack.c.h.b16 %v934
    %v1364 = vunpack.c.l.b16 %v935
    %v1365 = vunpack.c.h.b16 %v935
    %v1366 = vunpack.c.l.b16 %v936
    %v1367 = vunpack.c.h.b16 %v936
    %v1368 = vunpack.c.l.b16 %v937
    %v1369 = vunpack.c.h.b16 %v937
    %v1370 = vunpack.c.l.b16 %v938
    %v1371 = vunpack.c.h.b16 %v938
    %v1372 = vunpack.c.l.b16 %v939
    %v1373 = vunpack.c.h.b16 %v939
    %v1374 = vunpack.c.l.b16 %v940
    %v1375 = vunpack.c.h.b16 %v940
    %v1376 = vunpack.c.l.b16 %v941
    %v1377 = vunpack.c.h.b16 %v941
    %v1378 = vunpack.c.l.b16 %v942
    %v1379 = vunpack.c.h.b16 %v942
    %v1380 = vunpack.c.l.b16 %v943
    %v1381 = vunpack.c.h.b16 %v943
    %v1382 = vunpack.c.l.b16 %v944
    %v1383 = vunpack.c.h.b16 %v944
    %v1384 = vunpack.c.l.b16 %v945
    %v1385 = vunpack.c.h.b16 %v945
    %v1386 = vunpack.c.l.b16 %v946
    %v1387 = vunpack.c.h.b16 %v946
    %v1388 = vunpack.c.l.b16 %v947
    %v1389 = vunpack.c.h.b16 %v947
    %v1390 = vunpack.c.l.b16 %v948
    %v1391 = vunpack.c.h.b16 %v948
    %v1392 = vunpack.c.l.b16 %v949
    %v1393 = vunpack.c.h.b16 %v949
    %v1394 = vunpack.c.l.b16 %v950
    %v1395 = vunpack.c.h.b16 %v950
    %v1396 = vunpack.c.l.b16 %v951
    %v1397 = vunpack.c.h.b16 %v951
    %v1398 = vunpack.c.l.b16 %v952
    %v1399 = vunpack.c.h.b16 %v952
    %v1400 = vunpack.c.l.b16 %v953
    %v1401 = vunpack.c.h.b16 %v953
    %v1402 = vunpack.c.l.b16 %v954
    %v1403 = vunpack.c.h.b16 %v954
    %v1404 = vunpack.c.l.b16 %v955
    %v1405 = vunpack.c.h.b16 %v955
    %v1406 = vunpack.c.l.b16 %v956
    %v1407 = vunpack.c.h.b16 %v956
    %v1408 = vunpack.c.l.b16 %v957
    %v1409 = vunpack.c.h.b16 %v957
    %v1410 = vunpack.c.l.b16 %v958
    %v1411 = vunpack.c.h.b16 %v958
    %v1412 = vunpack.c.l.b16 %v959
    %v1413 = vunpack.c.h.b16 %v959
    %v1414 = vunpack.c.l.b16 %v960
    %v1415 = vunpack.c.h.b16 %v960
    %v1416 = vunpack.c.l.b16 %v961
    %v1417 = vunpack.c.h.b16 %v961
    %v1418 = vunpack.c.l.b16 %v962
    %v1419 = vunpack.c.h.b16 %v962
    %v1420 = vunpack.c.l.b16 %v963
    %v1421 = vunpack.c.h.b16 %v963
    %v1422 = vunpack.c.l.b16 %v964
    %v1423 = vunpack.c.h.b16 %v964
    %v1424 = vunpack.c.l.b16 %v965
    %v1425 = vunpack.c.h.b16 %v965
    %v1426 = vunpack.c.l.b16 %v966
    %v1427 = vunpack.c.h.b16 %v966
    %v1428 = vunpack.c.l.b16 %v967
    %v1429 = vunpack.c.h.b16 %v967
    %v1430 = vunpack.c.l.b16 %v968
    %v1431 = vunpack.c.h.b16 %v968
    %v1432 = vunpack.c.l.b16 %v969
    %v1433 = vunpack.c.h.b16 %v969
    %v1434 = vunpack.c.l.b16 %v970
    %v1435 = vunpack.c.h.b16 %v970
    %v1436 = vunpack.c.l.b16 %v971
    %v1437 = vunpack.c.h.b16 %v971
    %v1438 = vunpack.c.l.b16 %v972
    %v1439 = vunpack.c.h.b16 %v972
    %v1440 = vunpack.c.l.b16 %v973
    %v1441 = vunpack.c.h.b16 %v973
    %v1442 = vunpack.c.l.b16 %v974
    %v1443 = vunpack.c.h.b16 %v974
    %v1444 = vunpack.c.l.b16 %v975
    %v1445 = vunpack.c.h.b16 %v975
    %v1446 = vunpack.c.l.b16 %v976
    %v1447 = vunpack.c.h.b16 %v976
    %v1448 = vunpack.c.l.b16 %v977
    %v1449 = vunpack.c.h.b16 %v977
    %v1450 = vunpack.c.l.b16 %v978
    %v1451 = vunpack.c.h.b16 %v978
    %v1452 = vunpack.c.l.b16 %v979
    %v1453 = vunpack.c.h.b16 %v979
    %v1454 = vunpack.c.l.b16 %v980
    %v1455 = vunpack.c.h.b16 %v980
    %v1456 = vunpack.c.l.b16 %v981
    %v1457 = vunpack.c.h.b16 %v981
    %v1458 = vunpack.c.l.b16 %v982
    %v1459 = vunpack.c.h.b16 %v982
    %v1460 = vunpack.c.l.b16 %v983
    %v1461 = vunpack.c.h.b16 %v983
    %v1462 = vunpack.c.l.b16 %v984
    %v1463 = vunpack.c.h.b16 %v984
    %v1464 = vunpack.c.l.b16 %v985
    %v1465 = vunpack.c.h.b16 %v985
    %v1466 = vunpack.c.l.b16 %v986
    %v1467 = vunpack.c.h.b16 %v986
    %v1468 = vunpack.c.l.b16 %v987
    %v1469 = vunpack.c.h.b16 %v987
    %v1470 = vunpack.c.l.b16 %v988
    %v1471 = vunpack.c.h.b16 %v988
    %v1472 = vunpack.c.l.b16 %v989
    %v1473 = vunpack.c.h.b16 %v989
    %v1474 = vunpack.c.l.b16 %v990
    %v1475 = vunpack.c.h.b16 %v990
    %v1476 = vunpack.c.l.b16 %v991
    %v1477 = vunpack.c.h.b16 %v991
    %v1478 = vunpack.c.l.b16 %v992
    %v1479 = vunpack.c.h.b16 %v992
    %v1480 = vunpack.c.l.b16 %v993
    %v1481 = vunpack.c.h.b16 %v993
    %v1482 = vunpack.c.l.b16 %v994
    %v1483 = vunpack.c.h.b16 %v994
    %v1484 = vunpack.c.l.b16 %v995
    %v1485 = vunpack.c.h.b16 %v995
    %v1486 = vunpack.c.l.b16 %v996
    %v1487 = vunpack.c.h.b16 %v996
    %v1488 = vunpack.c.l.b16 %v997
    %v1489 = vunpack.c.h.b16 %v997
    %v1490 = vunpack.c.l.b16 %v998
    %v1491 = vunpack.c.h.b16 %v998
    %v1492 = vunpack.c.l.b16 %v999
    %v1493 = vunpack.c.h.b16 %v999
    %v1494 = vunpack.c.l.b16 %v1000
    %v1495 = vunpack.c.h.b16 %v1000
    %v1496 = vunpack.c.l.b16 %v1001
    %v1497 = vunpack.c.h.b16 %v1001
    %v1498 = vunpack.c.l.b16 %v1002
    %v1499 = vunpack.c.h.b16 %v1002
    %v1500 = vunpack.c.l.b16 %v1003
    %v1501 = vunpack.c.h.b16 %v1003
    %v1502 = vunpack.c.l.b16 %v1004
    %v1503 = vunpack.c.h.b16 %v1004
    %v1504 = vunpack.c.l.b16 %v1005
    %v1505 = vunpack.c.h.b16 %v1005
    %v1506 = vunpack.c.l.b16 %v1006
    %v1507 = vunpack.c.h.b16 %v1006
    %v1508 = vunpack.c.l.b16 %v1007
    %v1509 = vunpack.c.h.b16 %v1007
    %v1510 = vunpack.c.l.b16 %v1008
    %v1511 = vunpack.c.h.b16 %v1008
    %v1512 = vunpack.c.l.b16 %v1009
    %v1513 = vunpack.c.h.b16 %v1009
    %v1514 = vunpack.c.l.b16 %v1010
    %v1515 = vunpack.c.h.b16 %v1010
    %v1516 = vunpack.c.l.b16 %v1011
    %v1517 = vunpack.c.h.b16 %v1011
    %v1518 = vunpack.c.l.b16 %v1012
    %v1519 = vunpack.c.h.b16 %v1012
    %v1520 = vunpack.c.l.b16 %v1013
    %v1521 = vunpack.c.h.b16 %v1013
    %v1522 = vunpack.c.l.b16 %v1014
    %v1523 = vunpack.c.h.b16 %v1014
    %v1524 = vunpack.c.l.b16 %v1015
    %v1525 = vunpack.c.h.b16 %v1015
    %v1526 = vunpack.c.l.b16 %v1016
    %v1527 = vunpack.c.h.b16 %v1016
    %v1528 = vunpack.c.l.b16 %v1017
    %v1529 = vunpack.c.h.b16 %v1017
    %v1530 = vunpack.c.l.b16 %v1018
    %v1531 = vunpack.c.h.b16 %v1018
    %v1532 = vunpack.c.l.b16 %v1019
    %v1533 = vunpack.c.h.b16 %v1019
    %v1534 = vunpack.c.l.b16 %v1020
    %v1535 = vunpack.c.h.b16 %v1020
    %v1536 = vunpack.c.l.b16 %v1021
    %v1537 = vunpack.c.h.b16 %v1021
    %v1538 = vunpack.c.l.b16 %v1022
    %v1539 = vunpack.c.h.b16 %v1022
    %v1540 = vunpack.c.l.b16 %v1023
    %v1541 = vunpack.c.h.b16 %v1023
    %v1542 = vunpack.c.l.b16 %v1024
    %v1543 = vunpack.c.h.b16 %v1024
    %v1544 = vunpack.c.l.b16 %v1025
    %v1545 = vunpack.c.h.b16 %v1025
    %v1546 = vunpack.c.l.b16 %v1026
    %v1547 = vunpack.c.h.b16 %v1026
    %v1548 = vunpack.c.l.b16 %v1027
    %v1549 = vunpack.c.h.b16 %v1027
    %v1550 = vunpack.c.l.b16 %v1028
    %v1551 = vunpack.c.h.b16 %v1028
    %v1552 = vunpack.c.l.b16 %v1029
    %v1553 = vunpack.c.h.b16 %v1029
    %v1554 = vunpack.c.l.b16 %v1030
    %v1555 = vunpack.c.h.b16 %v1030
    %v1556 = vunpack.c.l.b16 %v1031
    %v1557 = vunpack.c.h.b16 %v1031
    %v1558 = vunpack.c.l.b16 %v1032
    %v1559 = vunpack.c.h.b16 %v1032
    %v1560 = vunpack.c.l.b16 %v1033
    %v1561 = vunpack.c.h.b16 %v1033
    %v1562 = vunpack.c.l.b16 %v1034
    %v1563 = vunpack.c.h.b16 %v1034
    %v1564 = vunpack.c.l.b16 %v1035
    %v1565 = vunpack.c.h.b16 %v1035
    %v1566 = vunpack.c.l.b16 %v1036
    %v1567 = vunpack.c.h.b16 %v1036
    %v1568 = vunpack.c.l.b16 %v1037
    %v1569 = vunpack.c.h.b16 %v1037
    %v1570 = vunpack.c.l.b16 %v1038
    %v1571 = vunpack.c.h.b16 %v1038
    %v1572 = vunpack.c.l.b16 %v1039
    %v1573 = vunpack.c.h.b16 %v1039
    %v1574 = vunpack.c.l.b16 %v1040
    %v1575 = vunpack.c.h.b16 %v1040
    %v1576 = vunpack.c.l.b16 %v1041
    %v1577 = vunpack.c.h.b16 %v1041
    %v1578 = vunpack.c.l.b16 %v1042
    %v1579 = vunpack.c.h.b16 %v1042
    %v1580 = vunpack.c.l.b16 %v1043
    %v1581 = vunpack.c.h.b16 %v1043
    %v1582 = vunpack.c.l.b16 %v1044
    %v1583 = vunpack.c.h.b16 %v1044
    %v1584 = vunpack.c.l.b16 %v1045
    %v1585 = vunpack.c.h.b16 %v1045
    %v1586 = vunpack.c.l.b16 %v1046
    %v1587 = vunpack.c.h.b16 %v1046
    %v1588 = vunpack.c.l.b16 %v1047
    %v1589 = vunpack.c.h.b16 %v1047
    %v1590 = vunpack.c.l.b16 %v1048
    %v1591 = vunpack.c.h.b16 %v1048
    %v1592 = vunpack.c.l.b16 %v1049
    %v1593 = vunpack.c.h.b16 %v1049
    %v1594 = vunpack.c.l.b16 %v1050
    %v1595 = vunpack.c.h.b16 %v1050
    %v1596 = vunpack.c.l.b16 %v1051
    %v1597 = vunpack.c.h.b16 %v1051
    %v1598 = vunpack.c.l.b16 %v1052
    %v1599 = vunpack.c.h.b16 %v1052
    %v1600 = vunpack.c.l.b16 %v1053
    %v1601 = vunpack.c.h.b16 %v1053
    %v1602 = vunpack.c.l.b16 %v1054
    %v1603 = vunpack.c.h.b16 %v1054
    %v1604 = vunpack.c.l.b16 %v1055
    %v1605 = vunpack.c.h.b16 %v1055
    %v1606 = vunpack.c.l.b16 %v1056
    %v1607 = vunpack.c.h.b16 %v1056
    %v1608 = vunpack.c.l.b16 %v1057
    %v1609 = vunpack.c.h.b16 %v1057
    %v1610 = vunpack.c.l.b16 %v1058
    %v1611 = vunpack.c.h.b16 %v1058
    %v1612 = vunpack.c.l.b16 %v1059
    %v1613 = vunpack.c.h.b16 %v1059
    %v1614 = vunpack.c.l.b16 %v1060
    %v1615 = vunpack.c.h.b16 %v1060
    %v1616 = vunpack.c.l.b16 %v1061
    %v1617 = vunpack.c.h.b16 %v1061
    %v1618 = vunpack.c.l.b16 %v1062
    %v1619 = vunpack.c.h.b16 %v1062
    %v1620 = vunpack.c.l.b16 %v1063
    %v1621 = vunpack.c.h.b16 %v1063
    %v1622 = vunpack.c.l.b16 %v1064
    %v1623 = vunpack.c.h.b16 %v1064
    %v1624 = vunpack.c.l.b16 %v1065
    %v1625 = vunpack.c.h.b16 %v1065
    %v1626 = vunpack.c.l.b16 %v1066
    %v1627 = vunpack.c.h.b16 %v1066
    %v1628 = vunpack.c.l.b16 %v1067
    %v1629 = vunpack.c.h.b16 %v1067
    %v1630 = vunpack.c.l.b16 %v1068
    %v1631 = vunpack.c.h.b16 %v1068
    %v1632 = vunpack.c.l.b16 %v1069
    %v1633 = vunpack.c.h.b16 %v1069
    %v1634 = vunpack.c.l.b16 %v1070
    %v1635 = vunpack.c.h.b16 %v1070
    %v1636 = vunpack.c.l.b16 %v1071
    %v1637 = vunpack.c.h.b16 %v1071
    %v1638 = vunpack.c.l.b16 %v1072
    %v1639 = vunpack.c.h.b16 %v1072
    %v1640 = vunpack.c.l.b16 %v1073
    %v1641 = vunpack.c.h.b16 %v1073
    %v1642 = vunpack.c.l.b16 %v1074
    %v1643 = vunpack.c.h.b16 %v1074
    %v1644 = vunpack.c.l.b16 %v1075
    %v1645 = vunpack.c.h.b16 %v1075
    %v1646 = vunpack.c.l.b16 %v1076
    %v1647 = vunpack.c.h.b16 %v1076
    %v1648 = vunpack.c.l.b16 %v1077
    %v1649 = vunpack.c.h.b16 %v1077
    %v1650 = vunpack.c.l.b16 %v1078
    %v1651 = vunpack.c.h.b16 %v1078
    %v1652 = vunpack.c.l.b16 %v1079
    %v1653 = vunpack.c.h.b16 %v1079
    %v1654 = vunpack.c.l.b16 %v1080
    %v1655 = vunpack.c.h.b16 %v1080
    %v1656 = vunpack.c.l.b16 %v1081
    %v1657 = vunpack.c.h.b16 %v1081
    %v1658 = vpack.c.b16 %v1282, %v1274
    %v1659 = vpack.c.b16 %v1283, %v1275
    %v1660 = vpack.c.b16 %v1284, %v1276
    %v1661 = vpack.c.b16 %v1285, %v1277
    %v1662 = vpack.c.b16 %v1286, %v1278
    %v1663 = vpack.c.b16 %v1287, %v1279
    %v1664 = vpack.c.b16 %v1288, %v1280
    %v1665 = vpack.c.b16 %v1289, %v1281
    %v1666 = vpack.c.b16 %v1298, %v1290
    %v1667 = vpack.c.b16 %v1299, %v1291
    %v1668 = vpack.c.b16 %v1300, %v1292
    %v1669 = vpack.c.b16 %v1301, %v1293
    %v1670 = vpack.c.b16 %v1302, %v1294
    %v1671 = vpack.c.b16 %v1303, %v1295
    %v1672 = vpack.c.b16 %v1304, %v1296
    %v1673 = vpack.c.b16 %v1305, %v1297
    %v1674 = vpack.c.b16 %v1314, %v1306
    %v1675 = vpack.c.b16 %v1315, %v1307
    %v1676 = vpack.c.b16 %v1316, %v1308
    %v1677 = vpack.c.b16 %v1317, %v1309
    %v1678 = vpack.c.b16 %v1318, %v1310
    %v1679 = vpack.c.b16 %v1319, %v1311
    %v1680 = vpack.c.b16 %v1320, %v1312
    %v1681 = vpack.c.b16 %v1321, %v1313
    %v1682 = vpack.c.b16 %v1330, %v1322
    %v1683 = vpack.c.b16 %v1331, %v1323
    %v1684 = vpack.c.b16 %v1332, %v1324
    %v1685 = vpack.c.b16 %v1333, %v1325
    %v1686 = vpack.c.b16 %v1334, %v1326
    %v1687 = vpack.c.b16 %v1335, %v1327
    %v1688 = vpack.c.b16 %v1336, %v1328
    %v1689 = vpack.c.b16 %v1337, %v1329
    %v1690 = vpack.c.b16 %v1346, %v1338
    %v1691 = vpack.c.b16 %v1347, %v1339
    %v1692 = vpack.c.b16 %v1348, %v1340
    %v1693 = vpack.c.b16 %v1349, %v1341
    %v1694 = vpack.c.b16 %v1350, %v1342
    %v1695 = vpack.c.b16 %v1351, %v1343
    %v1696 = vpack.c.b16 %v1352, %v1344
    %v1697 = vpack.c.b16 %v1353, %v1345
    %v1698 = vpack.c.b16 %v1362, %v1354
    %v1699 = vpack.c.b16 %v1363, %v1355
    %v1700 = vpack.c.b16 %v1364, %v1356
    %v1701 = vpack.c.b16 %v1365, %v1357
    %v1702 = vpack.c.b16 %v1366, %v1358
    %v1703 = vpack.c.b16 %v1367, %v1359
    %v1704 = vpack.c.b16 %v1368, %v1360
    %v1705 = vpack.c.b16 %v1369, %v1361
    %v1706 = vpack.c.b16 %v1378, %v1370
    %v1707 = vpack.c.b16 %v1379, %v1371
    %v1708 = vpack.c.b16 %v1380, %v1372
    %v1709 = vpack.c.b16 %v1381, %v1373
    %v1710 = vpack.c.b16 %v1382, %v1374
    %v1711 = vpack.c.b16 %v1383, %v1375
    %v1712 = vpack.c.b16 %v1384, %v1376
    %v1713 = vpack.c.b16 %v1385, %v1377
    %v1714 = vpack.c.b16 %v1394, %v1386
    %v1715 = vpack.c.b16 %v1395, %v1387
    %v1716 = vpack.c.b16 %v1396, %v1388
    %v1717 = vpack.c.b16 %v1397, %v1389
    %v1718 = vpack.c.b16 %v1398, %v1390
    %v1719 = vpack.c.b16 %v1399, %v1391
    %v1720 = vpack.c.b16 %v1400, %v1392
    %v1721 = vpack.c.b16 %v1401, %v1393
    %v1722 = vpack.c.b16 %v1410, %v1402
    %v1723 = vpack.c.b16 %v1411, %v1403
    %v1724 = vpack.c.b16 %v1412, %v1404
    %v1725 = vpack.c.b16 %v1413, %v1405
    %v1726 = vpack.c.b16 %v1414, %v1406
    %v1727 = vpack.c.b16 %v1415, %v1407
    %v1728 = vpack.c.b16 %v1416, %v1408
    %v1729 = vpack.c.b16 %v1417, %v1409
    %v1730 = vpack.c.b16 %v1426, %v1418
    %v1731 = vpack.c.b16 %v1427, %v1419
    %v1732 = vpack.c.b16 %v1428, %v1420
    %v1733 = vpack.c.b16 %v1429, %v1421
    %v1734 = vpack.c.b16 %v1430, %v1422
    %v1735 = vpack.c.b16 %v1431, %v1423
    %v1736 = vpack.c.b16 %v1432, %v1424
    %v1737 = vpack.c.b16 %v1433, %v1425
    %v1738 = vpack.c.b16 %v1442, %v1434
    %v1739 = vpack.c.b16 %v1443, %v1435
    %v1740 = vpack.c.b16 %v1444, %v1436
    %v1741 = vpack.c.b16 %v1445, %v1437
    %v1742 = vpack.c.b16 %v1446, %v1438
    %v1743 = vpack.c.b16 %v1447, %v1439
    %v1744 = vpack.c.b16 %v1448, %v1440
    %v1745 = vpack.c.b16 %v1449, %v1441
    %v1746 = vpack.c.b16 %v1458, %v1450
    %v1747 = vpack.c.b16 %v1459, %v1451
    %v1748 = vpack.c.b16 %v1460, %v1452
    %v1749 = vpack.c.b16 %v1461, %v1453
    %v1750 = vpack.c.b16 %v1462, %v1454
    %v1751 = vpack.c.b16 %v1463, %v1455
    %v1752 = vpack.c.b16 %v1464, %v1456
    %v1753 = vpack.c.b16 %v1465, %v1457
    %v1754 = vpack.c.b16 %v1474, %v1466
    %v1755 = vpack.c.b16 %v1475, %v1467
    %v1756 = vpack.c.b16 %v1476, %v1468
    %v1757 = vpack.c.b16 %v1477, %v1469
    %v1758 = vpack.c.b16 %v1478, %v1470
    %v1759 = vpack.c.b16 %v1479, %v1471
    %v1760 = vpack.c.b16 %v1480, %v1472
    %v1761 = vpack.c.b16 %v1481, %v1473
    %v1762 = vpack.c.b16 %v1490, %v1482
    %v1763 = vpack.c.b16 %v1491, %v1483
    %v1764 = vpack.c.b16 %v1492, %v1484
    %v1765 = vpack.c.b16 %v1493, %v1485
    %v1766 = vpack.c.b16 %v1494, %v1486
    %v1767 = vpack.c.b16 %v1495, %v1487
    %v1768 = vpack.c.b16 %v1496, %v1488
    %v1769 = vpack.c.b16 %v1497, %v1489
    %v1770 = vpack.c.b16 %v1506, %v1498
    %v1771 = vpack.c.b16 %v1507, %v1499
    %v1772 = vpack.c.b16 %v1508, %v1500
    %v1773 = vpack.c.b16 %v1509, %v1501
    %v1774 = vpack.c.b16 %v1510, %v1502
    %v1775 = vpack.c.b16 %v1511, %v1503
    %v1776 = vpack.c.b16 %v1512, %v1504
    %v1777 = vpack.c.b16 %v1513, %v1505
    %v1778 = vpack.c.b16 %v1522, %v1514
    %v1779 = vpack.c.b16 %v1523, %v1515
    %v1780 = vpack.c.b16 %v1524, %v1516
    %v1781 = vpack.c.b16 %v1525, %v1517
    %v1782 = vpack.c.b16 %v1526, %v1518
    %v1783 = vpack.c.b16 %v1527, %v1519
    %v1784 = vpack.c.b16 %v1528, %v1520
    %v1785 = vpack.c.b16 %v1529, %v1521
    %v1786 = vpack.c.b16 %v1538, %v1530
    %v1787 = vpack.c.b16 %v1539, %v1531
    %v1788 = vpack.c.b16 %v1540, %v1532
    %v1789 = vpack.c.b16 %v1541, %v1533
    %v1790 = vpack.c.b16 %v1542, %v1534
    %v1791 = vpack.c.b16 %v1543, %v1535
    %v1792 = vpack.c.b16 %v1544, %v1536
    %v1793 = vpack.c.b16 %v1545, %v1537
    %v1794 = vpack.c.b16 %v1554, %v1546
    %v1795 = vpack.c.b16 %v1555, %v1547
    %v1796 = vpack.c.b16 %v1556, %v1548
    %v1797 = vpack.c.b16 %v1557, %v1549
    %v1798 = vpack.c.b16 %v1558, %v1550
    %v1799 = vpack.c.b16 %v1559, %v1551
    %v1800 = vpack.c.b16 %v1560, %v1552
    %v1801 = vpack.c.b16 %v1561, %v1553
    %v1802 = vpack.c.b16 %v1570, %v1562
    %v1803 = vpack.c.b16 %v1571, %v1563
    %v1804 = vpack.c.b16 %v1572, %v1564
    %v1805 = vpack.c.b16 %v1573, %v1565
    %v1806 = vpack.c.b16 %v1574, %v1566
    %v1807 = vpack.c.b16 %v1575, %v1567
    %v1808 = vpack.c.b16 %v1576, %v1568
    %v1809 = vpack.c.b16 %v1577, %v1569
    %v1810 = vpack.c.b16 %v1586, %v1578
    %v1811 = vpack.c.b16 %v1587, %v1579
    %v1812 = vpack.c.b16 %v1588, %v1580
    %v1813 = vpack.c.b16 %v1589, %v1581
    %v1814 = vpack.c.b16 %v1590, %v1582
    %v1815 = vpack.c.b16 %v1591, %v1583
    %v1816 = vpack.c.b16 %v1592, %v1584
    %v1817 = vpack.c.b16 %v1593, %v1585
    %v1818 = vpack.c.b16 %v1602, %v1594
    %v1819 = vpack.c.b16 %v1603, %v1595
    %v1820 = vpack.c.b16 %v1604, %v1596
    %v1821 = vpack.c.b16 %v1605, %v1597
    %v1822 = vpack.c.b16 %v1606, %v1598
    %v1823 = vpack.c.b16 %v1607, %v1599
    %v1824 = vpack.c.b16 %v1608, %v1600
    %v1825 = vpack.c.b16 %v1609, %v1601
    %v1826 = vpack.c.b16 %v1618, %v1610
    %v1827 = vpack.c.b16 %v1619, %v1611
    %v1828 = vpack.c.b16 %v1620, %v1612
    %v1829 = vpack.c.b16 %v1621, %v1613
    %v1830 = vpack.c.b16 %v1622, %v1614
    %v1831 = vpack.c.b16 %v1623, %v1615
    %v1832 = vpack.c.b16 %v1624, %v1616
    %v1833 = vpack.c.b16 %v1625, %v1617
    %v1834 = vpack.c.b16 %v1634, %v1626
    %v1835 = vpack.c.b16 %v1635, %v1627
    %v1836 = vpack.c.b16 %v1636, %v1628
    %v1837 = vpack.c.b16 %v1637, %v1629
    %v1838 = vpack.c.b16 %v1638, %v1630
    %v1839 = vpack.c.b16 %v1639, %v1631
    %v1840 = vpack.c.b16 %v1640, %v1632
    %v1841 = vpack.c.b16 %v1641, %v1633
    %v1842 = vpack.c.b16 %v1650, %v1642
    %v1843 = vpack.c.b16 %v1651, %v1643
    %v1844 = vpack.c.b16 %v1652, %v1644
    %v1845 = vpack.c.b16 %v1653, %v1645
    %v1846 = vpack.c.b16 %v1654, %v1646
    %v1847 = vpack.c.b16 %v1655, %v1647
    %v1848 = vpack.c.b16 %v1656, %v1648
    %v1849 = vpack.c.b16 %v1657, %v1649
    %2042 = vmatprep.subr.bf16.mxu0 %v1659
    %2043 = vmatpush1.bf16.msra.mxu0 %v1658
    %2044 = vmatprep.subr.bf16.mxu0 %v1667
    %2045 = vmatpush1.bf16.msra.mxu0 %v1666
    %2046 = vmatprep.subr.bf16.mxu0 %v1675
    %2047 = vmatpush1.bf16.msra.mxu0 %v1674
    %2048 = vmatprep.subr.bf16.mxu0 %v1683
    %2049 = vmatpush1.bf16.msra.mxu0 %v1682
    %2050 = vmatprep.subr.bf16.mxu0 %v1691
    %2051 = vmatpush1.bf16.msra.mxu0 %v1690
    %2052 = vmatprep.subr.bf16.mxu0 %v1699
    %2053 = vmatpush1.bf16.msra.mxu0 %v1698
    %2054 = vmatprep.subr.bf16.mxu0 %v1707
    %2055 = vmatpush1.bf16.msra.mxu0 %v1706
    %2056 = vmatprep.subr.bf16.mxu0 %v1715
    %2057 = vmatpush1.bf16.msra.mxu0 %v1714
    %2058 = vmatprep.subr.bf16.mxu0 %v1723
    %2059 = vmatpush1.bf16.msra.mxu0 %v1722
    %2060 = vmatprep.subr.bf16.mxu0 %v1731
    %2061 = vmatpush1.bf16.msra.mxu0 %v1730
    %2062 = vmatprep.subr.bf16.mxu0 %v1739
    %2063 = vmatpush1.bf16.msra.mxu0 %v1738
    %2064 = vmatprep.subr.bf16.mxu0 %v1747
    %2065 = vmatpush1.bf16.msra.mxu0 %v1746
    %2066 = vmatprep.subr.bf16.mxu0 %v1755
    %2067 = vmatpush1.bf16.msra.mxu0 %v1754
    %2068 = vmatprep.subr.bf16.mxu0 %v1763
    %2069 = vmatpush1.bf16.msra.mxu0 %v1762
    %2070 = vmatprep.subr.bf16.mxu0 %v1771
    %2071 = vmatpush1.bf16.msra.mxu0 %v1770
    %2072 = vmatprep.subr.bf16.mxu0 %v1779
    %2073 = vmatpush1.bf16.msra.mxu0 %v1778
    %2074 = vmatprep.mubr.bf16.mxu0 %v888
    %2075 = vmatmul.mubr.bf16.gmra.mrb[0].mxu0 %v887
    %v2076 = vpop.f32.mrb[0].mxu0
    %v2077 = vadd.f32 0.0, %v2076
    %v2078 = vpop.f32.mrb[0].mxu0
    %v2079 = vadd.f32 0.0, %v2078
    %v2080 = vpop.f32.mrb[0].mxu0
    %v2081 = vadd.f32 0.0, %v2080
    %v2082 = vpop.f32.mrb[0].mxu0
    %v2083 = vadd.f32 0.0, %v2082
    %2084 = vdwg.mxu0
    %2085 = vmatprep.subr.bf16.mxu0 %v1787
    %2086 = vmatpush1.bf16.msra.mxu0 %v1786
    %2087 = vmatprep.subr.bf16.mxu0 %v1795
    %2088 = vmatpush1.bf16.msra.mxu0 %v1794
    %2089 = vmatprep.subr.bf16.mxu0 %v1803
    %2090 = vmatpush1.bf16.msra.mxu0 %v1802
    %2091 = vmatprep.subr.bf16.mxu0 %v1811
    %2092 = vmatpush1.bf16.msra.mxu0 %v1810
    %2093 = vmatprep.subr.bf16.mxu0 %v1819
    %2094 = vmatpush1.bf16.msra.mxu0 %v1818
    %2095 = vmatprep.subr.bf16.mxu0 %v1827
    %2096 = vmatpush1.bf16.msra.mxu0 %v1826
    %2097 = vmatprep.subr.bf16.mxu0 %v1835
    %2098 = vmatpush1.bf16.msra.mxu0 %v1834
    %2099 = vmatprep.subr.bf16.mxu0 %v1843
    %2100 = vmatpush1.bf16.msra.mxu0 %v1842
    %2101 = vmatprep.subr.bf16.mxu0 0
    %2102 = vmatpush1.bf16.msra.mxu0 0
    %2103 = vmatprep.subr.bf16.mxu0 0
    %2104 = vmatpush1.bf16.msra.mxu0 0
    %2105 = vmatprep.subr.bf16.mxu0 0
    %2106 = vmatpush1.bf16.msra.mxu0 0
    %2107 = vmatprep.subr.bf16.mxu0 0
    %2108 = vmatpush1.bf16.msra.mxu0 0
    %2109 = vmatprep.subr.bf16.mxu0 0
    %2110 = vmatpush1.bf16.msra.mxu0 0
    %2111 = vmatprep.subr.bf16.mxu0 0
    %2112 = vmatpush1.bf16.msra.mxu0 0
    %2113 = vmatprep.subr.bf16.mxu0 0
    %2114 = vmatpush1.bf16.msra.mxu0 0
    %2115 = vmatprep.subr.bf16.mxu0 0
    %2116 = vmatpush1.bf16.msra.mxu0 0
    %2117 = vmatprep.mubr.bf16.mxu0 0
    %2118 = vmatmul.mubr.bf16.gmra.mrb[0].mxu0 %v889
    %v2119 = vpop.f32.mrb[0].mxu0
    %v2120 = vadd.f32 %v2077, %v2119
    %v2121 = vpop.f32.mrb[0].mxu0
    %v2122 = vadd.f32 %v2079, %v2121
    %v2123 = vpop.f32.mrb[0].mxu0
    %v2124 = vadd.f32 %v2081, %v2123
    %v2125 = vpop.f32.mrb[0].mxu0
    %v2126 = vadd.f32 %v2083, %v2125
    %2127 = vdwg.mxu0
    %2128 = vmatprep.subr.bf16.mxu0 %v1661
    %2129 = vmatpush1.bf16.msra.mxu0 %v1660
    %2130 = vmatprep.subr.bf16.mxu0 %v1669
    %2131 = vmatpush1.bf16.msra.mxu0 %v1668
    %2132 = vmatprep.subr.bf16.mxu0 %v1677
    %2133 = vmatpush1.bf16.msra.mxu0 %v1676
    %2134 = vmatprep.subr.bf16.mxu0 %v1685
    %2135 = vmatpush1.bf16.msra.mxu0 %v1684
    %2136 = vmatprep.subr.bf16.mxu0 %v1693
    %2137 = vmatpush1.bf16.msra.mxu0 %v1692
    %2138 = vmatprep.subr.bf16.mxu0 %v1701
    %2139 = vmatpush1.bf16.msra.mxu0 %v1700
    %2140 = vmatprep.subr.bf16.mxu0 %v1709
    %2141 = vmatpush1.bf16.msra.mxu0 %v1708
    %2142 = vmatprep.subr.bf16.mxu0 %v1717
    %2143 = vmatpush1.bf16.msra.mxu0 %v1716
    %2144 = vmatprep.subr.bf16.mxu0 %v1725
    %2145 = vmatpush1.bf16.msra.mxu0 %v1724
    %2146 = vmatprep.subr.bf16.mxu0 %v1733
    %2147 = vmatpush1.bf16.msra.mxu0 %v1732
    %2148 = vmatprep.subr.bf16.mxu0 %v1741
    %2149 = vmatpush1.bf16.msra.mxu0 %v1740
    %2150 = vmatprep.subr.bf16.mxu0 %v1749
    %2151 = vmatpush1.bf16.msra.mxu0 %v1748
    %2152 = vmatprep.subr.bf16.mxu0 %v1757
    %2153 = vmatpush1.bf16.msra.mxu0 %v1756
    %2154 = vmatprep.subr.bf16.mxu0 %v1765
    %2155 = vmatpush1.bf16.msra.mxu0 %v1764
    %2156 = vmatprep.subr.bf16.mxu0 %v1773
    %2157 = vmatpush1.bf16.msra.mxu0 %v1772
    %2158 = vmatprep.subr.bf16.mxu0 %v1781
    %2159 = vmatpush1.bf16.msra.mxu0 %v1780
    %2160 = vmatprep.mubr.bf16.mxu0 %v888
    %2161 = vmatmul.mubr.bf16.gmra.mrb[0].mxu0 %v887
    %v2162 = vpop.f32.mrb[0].mxu0
    %v2163 = vadd.f32 0.0, %v2162
    %v2164 = vpop.f32.mrb[0].mxu0
    %v2165 = vadd.f32 0.0, %v2164
    %v2166 = vpop.f32.mrb[0].mxu0
    %v2167 = vadd.f32 0.0, %v2166
    %v2168 = vpop.f32.mrb[0].mxu0
    %v2169 = vadd.f32 0.0, %v2168
    %2170 = vdwg.mxu0
    %2171 = vmatprep.subr.bf16.mxu0 %v1789
    %2172 = vmatpush1.bf16.msra.mxu0 %v1788
    %2173 = vmatprep.subr.bf16.mxu0 %v1797
    %2174 = vmatpush1.bf16.msra.mxu0 %v1796
    %2175 = vmatprep.subr.bf16.mxu0 %v1805
    %2176 = vmatpush1.bf16.msra.mxu0 %v1804
    %2177 = vmatprep.subr.bf16.mxu0 %v1813
    %2178 = vmatpush1.bf16.msra.mxu0 %v1812
    %2179 = vmatprep.subr.bf16.mxu0 %v1821
    %2180 = vmatpush1.bf16.msra.mxu0 %v1820
    %2181 = vmatprep.subr.bf16.mxu0 %v1829
    %2182 = vmatpush1.bf16.msra.mxu0 %v1828
    %2183 = vmatprep.subr.bf16.mxu0 %v1837
    %2184 = vmatpush1.bf16.msra.mxu0 %v1836
    %2185 = vmatprep.subr.bf16.mxu0 %v1845
    %2186 = vmatpush1.bf16.msra.mxu0 %v1844
    %2187 = vmatprep.subr.bf16.mxu0 0
    %2188 = vmatpush1.bf16.msra.mxu0 0
    %2189 = vmatprep.subr.bf16.mxu0 0
    %2190 = vmatpush1.bf16.msra.mxu0 0
    %2191 = vmatprep.subr.bf16.mxu0 0
    %2192 = vmatpush1.bf16.msra.mxu0 0
    %2193 = vmatprep.subr.bf16.mxu0 0
    %2194 = vmatpush1.bf16.msra.mxu0 0
    %2195 = vmatprep.subr.bf16.mxu0 0
    %2196 = vmatpush1.bf16.msra.mxu0 0
    %2197 = vmatprep.subr.bf16.mxu0 0
    %2198 = vmatpush1.bf16.msra.mxu0 0
    %2199 = vmatprep.subr.bf16.mxu0 0
    %2200 = vmatpush1.bf16.msra.mxu0 0
    %2201 = vmatprep.subr.bf16.mxu0 0
    %2202 = vmatpush1.bf16.msra.mxu0 0
    %2203 = vmatprep.mubr.bf16.mxu0 0
    %2204 = vmatmul.mubr.bf16.gmra.mrb[0].mxu0 %v889
    %v2205 = vpop.f32.mrb[0].mxu0
    %v2206 = vadd.f32 %v2163, %v2205
    %v2207 = vpop.f32.mrb[0].mxu0
    %v2208 = vadd.f32 %v2165, %v2207
    %v2209 = vpop.f32.mrb[0].mxu0
    %v2210 = vadd.f32 %v2167, %v2209
    %v2211 = vpop.f32.mrb[0].mxu0
    %v2212 = vadd.f32 %v2169, %v2211
    %2213 = vdwg.mxu0
    %2214 = vmatprep.subr.bf16.mxu0 %v1663
    %2215 = vmatpush1.bf16.msra.mxu0 %v1662
    %2216 = vmatprep.subr.bf16.mxu0 %v1671
    %2217 = vmatpush1.bf16.msra.mxu0 %v1670
    %2218 = vmatprep.subr.bf16.mxu0 %v1679
    %2219 = vmatpush1.bf16.msra.mxu0 %v1678
    %2220 = vmatprep.subr.bf16.mxu0 %v1687
    %2221 = vmatpush1.bf16.msra.mxu0 %v1686
    %2222 = vmatprep.subr.bf16.mxu0 %v1695
    %2223 = vmatpush1.bf16.msra.mxu0 %v1694
    %2224 = vmatprep.subr.bf16.mxu0 %v1703
    %2225 = vmatpush1.bf16.msra.mxu0 %v1702
    %2226 = vmatprep.subr.bf16.mxu0 %v1711
    %2227 = vmatpush1.bf16.msra.mxu0 %v1710
    %2228 = vmatprep.subr.bf16.mxu0 %v1719
    %2229 = vmatpush1.bf16.msra.mxu0 %v1718
    %2230 = vmatprep.subr.bf16.mxu0 %v1727
    %2231 = vmatpush1.bf16.msra.mxu0 %v1726
    %2232 = vmatprep.subr.bf16.mxu0 %v1735
    %2233 = vmatpush1.bf16.msra.mxu0 %v1734
    %2234 = vmatprep.subr.bf16.mxu0 %v1743
    %2235 = vmatpush1.bf16.msra.mxu0 %v1742
    %2236 = vmatprep.subr.bf16.mxu0 %v1751
    %2237 = vmatpush1.bf16.msra.mxu0 %v1750
    %2238 = vmatprep.subr.bf16.mxu0 %v1759
    %2239 = vmatpush1.bf16.msra.mxu0 %v1758
    %2240 = vmatprep.subr.bf16.mxu0 %v1767
    %2241 = vmatpush1.bf16.msra.mxu0 %v1766
    %2242 = vmatprep.subr.bf16.mxu0 %v1775
    %2243 = vmatpush1.bf16.msra.mxu0 %v1774
    %2244 = vmatprep.subr.bf16.mxu0 %v1783
    %2245 = vmatpush1.bf16.msra.mxu0 %v1782
    %2246 = vmatprep.mubr.bf16.mxu0 %v888
    %2247 = vmatmul.mubr.bf16.gmra.mrb[0].mxu0 %v887
    %v2248 = vpop.f32.mrb[0].mxu0
    %v2249 = vadd.f32 0.0, %v2248
    %v2250 = vpop.f32.mrb[0].mxu0
    %v2251 = vadd.f32 0.0, %v2250
    %v2252 = vpop.f32.mrb[0].mxu0
    %v2253 = vadd.f32 0.0, %v2252
    %v2254 = vpop.f32.mrb[0].mxu0
    %v2255 = vadd.f32 0.0, %v2254
    %2256 = vdwg.mxu0
    %2257 = vmatprep.subr.bf16.mxu0 %v1791
    %2258 = vmatpush1.bf16.msra.mxu0 %v1790
    %2259 = vmatprep.subr.bf16.mxu0 %v1799
    %2260 = vmatpush1.bf16.msra.mxu0 %v1798
    %2261 = vmatprep.subr.bf16.mxu0 %v1807
    %2262 = vmatpush1.bf16.msra.mxu0 %v1806
    %2263 = vmatprep.subr.bf16.mxu0 %v1815
    %2264 = vmatpush1.bf16.msra.mxu0 %v1814
    %2265 = vmatprep.subr.bf16.mxu0 %v1823
    %2266 = vmatpush1.bf16.msra.mxu0 %v1822
    %2267 = vmatprep.subr.bf16.mxu0 %v1831
    %2268 = vmatpush1.bf16.msra.mxu0 %v1830
    %2269 = vmatprep.subr.bf16.mxu0 %v1839
    %2270 = vmatpush1.bf16.msra.mxu0 %v1838
    %2271 = vmatprep.subr.bf16.mxu0 %v1847
    %2272 = vmatpush1.bf16.msra.mxu0 %v1846
    %2273 = vmatprep.subr.bf16.mxu0 0
    %2274 = vmatpush1.bf16.msra.mxu0 0
    %2275 = vmatprep.subr.bf16.mxu0 0
    %2276 = vmatpush1.bf16.msra.mxu0 0
    %2277 = vmatprep.subr.bf16.mxu0 0
    %2278 = vmatpush1.bf16.msra.mxu0 0
    %2279 = vmatprep.subr.bf16.mxu0 0
    %2280 = vmatpush1.bf16.msra.mxu0 0
    %2281 = vmatprep.subr.bf16.mxu0 0
    %2282 = vmatpush1.bf16.msra.mxu0 0
    %2283 = vmatprep.subr.bf16.mxu0 0
    %2284 = vmatpush1.bf16.msra.mxu0 0
    %2285 = vmatprep.subr.bf16.mxu0 0
    %2286 = vmatpush1.bf16.msra.mxu0 0
    %2287 = vmatprep.subr.bf16.mxu0 0
    %2288 = vmatpush1.bf16.msra.mxu0 0
    %2289 = vmatprep.mubr.bf16.mxu0 0
    %2290 = vmatmul.mubr.bf16.gmra.mrb[0].mxu0 %v889
    %v2291 = vpop.f32.mrb[0].mxu0
    %v2292 = vadd.f32 %v2249, %v2291
    %v2293 = vpop.f32.mrb[0].mxu0
    %v2294 = vadd.f32 %v2251, %v2293
    %v2295 = vpop.f32.mrb[0].mxu0
    %v2296 = vadd.f32 %v2253, %v2295
    %v2297 = vpop.f32.mrb[0].mxu0
    %v2298 = vadd.f32 %v2255, %v2297
    %2299 = vdwg.mxu0
    %2300 = vmatprep.subr.bf16.mxu0 %v1665
    %2301 = vmatpush1.bf16.msra.mxu0 %v1664
    %2302 = vmatprep.subr.bf16.mxu0 %v1673
    %2303 = vmatpush1.bf16.msra.mxu0 %v1672
    %2304 = vmatprep.subr.bf16.mxu0 %v1681
    %2305 = vmatpush1.bf16.msra.mxu0 %v1680
    %2306 = vmatprep.subr.bf16.mxu0 %v1689
    %2307 = vmatpush1.bf16.msra.mxu0 %v1688
    %2308 = vmatprep.subr.bf16.mxu0 %v1697
    %2309 = vmatpush1.bf16.msra.mxu0 %v1696
    %2310 = vmatprep.subr.bf16.mxu0 %v1705
    %2311 = vmatpush1.bf16.msra.mxu0 %v1704
    %2312 = vmatprep.subr.bf16.mxu0 %v1713
    %2313 = vmatpush1.bf16.msra.mxu0 %v1712
    %2314 = vmatprep.subr.bf16.mxu0 %v1721
    %2315 = vmatpush1.bf16.msra.mxu0 %v1720
    %2316 = vmatprep.subr.bf16.mxu0 %v1729
    %2317 = vmatpush1.bf16.msra.mxu0 %v1728
    %2318 = vmatprep.subr.bf16.mxu0 %v1737
    %2319 = vmatpush1.bf16.msra.mxu0 %v1736
    %2320 = vmatprep.subr.bf16.mxu0 %v1745
    %2321 = vmatpush1.bf16.msra.mxu0 %v1744
    %2322 = vmatprep.subr.bf16.mxu0 %v1753
    %2323 = vmatpush1.bf16.msra.mxu0 %v1752
    %2324 = vmatprep.subr.bf16.mxu0 %v1761
    %2325 = vmatpush1.bf16.msra.mxu0 %v1760
    %2326 = vmatprep.subr.bf16.mxu0 %v1769
    %2327 = vmatpush1.bf16.msra.mxu0 %v1768
    %2328 = vmatprep.subr.bf16.mxu0 %v1777
    %2329 = vmatpush1.bf16.msra.mxu0 %v1776
    %2330 = vmatprep.subr.bf16.mxu0 %v1785
    %2331 = vmatpush1.bf16.msra.mxu0 %v1784
    %2332 = vmatprep.mubr.bf16.mxu0 %v888
    %2333 = vmatmul.mubr.bf16.gmra.mrb[0].mxu0 %v887
    %v2334 = vpop.f32.mrb[0].mxu0
    %v2335 = vadd.f32 0.0, %v2334
    %v2336 = vpop.f32.mrb[0].mxu0
    %v2337 = vadd.f32 0.0, %v2336
    %v2338 = vpop.f32.mrb[0].mxu0
    %v2339 = vadd.f32 0.0, %v2338
    %v2340 = vpop.f32.mrb[0].mxu0
    %v2341 = vadd.f32 0.0, %v2340
    %2342 = vdwg.mxu0
    %2343 = vmatprep.subr.bf16.mxu0 %v1793
    %2344 = vmatpush1.bf16.msra.mxu0 %v1792
    %2345 = vmatprep.subr.bf16.mxu0 %v1801
    %2346 = vmatpush1.bf16.msra.mxu0 %v1800
    %2347 = vmatprep.subr.bf16.mxu0 %v1809
    %2348 = vmatpush1.bf16.msra.mxu0 %v1808
    %2349 = vmatprep.subr.bf16.mxu0 %v1817
    %2350 = vmatpush1.bf16.msra.mxu0 %v1816
    %2351 = vmatprep.subr.bf16.mxu0 %v1825
    %2352 = vmatpush1.bf16.msra.mxu0 %v1824
    %2353 = vmatprep.subr.bf16.mxu0 %v1833
    %2354 = vmatpush1.bf16.msra.mxu0 %v1832
    %2355 = vmatprep.subr.bf16.mxu0 %v1841
    %2356 = vmatpush1.bf16.msra.mxu0 %v1840
    %2357 = vmatprep.subr.bf16.mxu0 %v1849
    %2358 = vmatpush1.bf16.msra.mxu0 %v1848
    %2359 = vmatprep.subr.bf16.mxu0 0
    %2360 = vmatpush1.bf16.msra.mxu0 0
    %2361 = vmatprep.subr.bf16.mxu0 0
    %2362 = vmatpush1.bf16.msra.mxu0 0
    %2363 = vmatprep.subr.bf16.mxu0 0
    %2364 = vmatpush1.bf16.msra.mxu0 0
    %2365 = vmatprep.subr.bf16.mxu0 0
    %2366 = vmatpush1.bf16.msra.mxu0 0
    %2367 = vmatprep.subr.bf16.mxu0 0
    %2368 = vmatpush1.bf16.msra.mxu0 0
    %2369 = vmatprep.subr.bf16.mxu0 0
    %2370 = vmatpush1.bf16.msra.mxu0 0
    %2371 = vmatprep.subr.bf16.mxu0 0
    %2372 = vmatpush1.bf16.msra.mxu0 0
    %2373 = vmatprep.subr.bf16.mxu0 0
    %2374 = vmatpush1.bf16.msra.mxu0 0
    %2375 = vmatprep.mubr.bf16.mxu0 0
    %2376 = vmatmul.mubr.bf16.gmra.mrb[0].mxu0 %v889
    %v2377 = vpop.f32.mrb[0].mxu0
    %v2378 = vadd.f32 %v2335, %v2377
    %v2379 = vpop.f32.mrb[0].mxu0
    %v2380 = vadd.f32 %v2337, %v2379
    %v2381 = vpop.f32.mrb[0].mxu0
    %v2382 = vadd.f32 %v2339, %v2381
    %v2383 = vpop.f32.mrb[0].mxu0
    %v2384 = vadd.f32 %v2341, %v2383
    %2385 = vdwg.mxu0
    %2386 = vst [vmem:[#allocation10] sm:$0xff] %v2120
    %2387 = vst [vmem:[#allocation10 + $0x8] sm:$0xff] %v2122
    %2388 = vst [vmem:[#allocation10 + $0x10] sm:$0xff] %v2206
    %2389 = vst [vmem:[#allocation10 + $0x18] sm:$0xff] %v2208
    %2390 = vst [vmem:[#allocation10 + $0x20] sm:$0xff] %v2292
    %2391 = vst [vmem:[#allocation10 + $0x28] sm:$0xff] %v2294
    %2392 = vst [vmem:[#allocation10 + $0x30] sm:$0xff] %v2378
    %2393 = vst [vmem:[#allocation10 + $0x38] sm:$0xff] %v2380
    %2394 = vst [vmem:[#allocation10 + $0x40] sm:$0xff] %v2124
    %2395 = vst [vmem:[#allocation10 + $0x48] sm:$0xff] %v2126
    %2396 = vst [vmem:[#allocation10 + $0x50] sm:$0xff] %v2210
    %2397 = vst [vmem:[#allocation10 + $0x58] sm:$0xff] %v2212
    %2398 = vst [vmem:[#allocation10 + $0x60] sm:$0xff] %v2296
    %2399 = vst [vmem:[#allocation10 + $0x68] sm:$0xff] %v2298
    %2400 = vst [vmem:[#allocation10 + $0x70] sm:$0xff] %v2382
    %2401 = vst [vmem:[#allocation10 + $0x78] sm:$0xff] %v2384
    // Predicated region
    $region38: #{tpu_custom_call.1} parent=1 // pred_check
      _
    $region39: #{tpu_custom_call.1} parent=1 // pred_check_branch
      %2403 = sbr.rel (0) target = $region41
    $region40: #{tpu_custom_call.1} parent=1 // pred_region
      %s2405 = ssub.s32 2048, 2048
      %2406 = vsyncadd [#allocation4], %s2405
      %s2407 = sshll.u32 [#allocation10], 4
      %s2408 = int_to_ptr.vmem [resolvable:$true] %s2407
      %2413 = dma.vmem_to_hbm [thread:$0]  %s2408, 2048, %s5, [#allocation4], 1024, 1024, 64
    $region41: #{tpu_custom_call.1} parent=1 // pred_fallthru
      _
    // Predicated region
    $region42: #{tpu_custom_call.1} parent=1 // pred_check
      _
    $region43: #{tpu_custom_call.1} parent=1 // pred_check_branch
      %2415 = sbr.rel (0) target = $region45
    $region44: #{tpu_custom_call.1} parent=1 // pred_region
      %2416 = dma.done [#allocation4], 2048
    $region45: #{tpu_custom_call.1} parent=1 // pred_fallthru
      _
    %2417 = vsyncpa [#allocation3], 1
    %2418 = vsyncpa [#allocation6], 1
    %2419 = vsyncpa [#allocation9], 1
    %2420 = vsyncpa [#allocation4], 1

</llo_original>
